<compile_context>
chip_gen: v6e
topology: v6e:2x2x1
jax: 0.10.0
libtpu: 0.0.40
codegen_flags: <defaults>
</compile_context>

<pallas_src>
import math
import functools

import jax
import jax.numpy as jnp
from jax import lax
from jax.experimental import pallas as pl
from jax.experimental.pallas import tpu as pltpu


def _self_attn_kernel(x_ref, wqkv_ref, bqkv_ref, mask_ref, ctx_ref, *probs_refs,
                      h_blk, head_dim, scale):
    # x_ref:     (1, L, F)          bf16  one batch row-slab (resident across head steps)
    # wqkv_ref:  (1, F, 3*hd_blk)   bf16  [Wq_blk | Wk_blk | Wv_blk], stored [in, out]
    # bqkv_ref:  (1, 1, 3*hd_blk)   f32
    # mask_ref:  (1, 1, L)          f32   additive mask (0 / -10000)
    # ctx_ref:   (1, L, hd_blk)           context columns owned by this head block
    # probs_refs: optionally ((1, h_blk, L, L) bf16,)
    probs_ref = probs_refs[0] if probs_refs else None

    x = x_ref[0]                                   # (L, F) bf16
    L = x.shape[0]
    hd_blk = h_blk * head_dim

    # QKV projection for this head block only (bf16 operands, f32 accumulation).
    qkv = jnp.dot(x, wqkv_ref[0],
                  preferred_element_type=jnp.float32) + bqkv_ref[0]   # (L, 3*hd_blk) f32
    q = (qkv[:, :hd_blk] * scale).astype(jnp.bfloat16)   # fold 1/sqrt(dh) into Q
    k = qkv[:, hd_blk:2 * hd_blk].astype(jnp.bfloat16)
    v = qkv[:, 2 * hd_blk:].astype(jnp.bfloat16)

    # Hoist the (1,L)->(L,L) mask broadcast out of the unrolled head loop
    # (JAX does not CSE broadcast_in_dim).
    mask_b = jnp.broadcast_to(mask_ref[0], (L, L))        # (L, L) f32

    # TODO(synk): head_dim-wide contraction underfills the 256-wide v6e/v7x MXU;
    # packing several heads into one MXU pass needs a block-diagonal relayout and
    # is left out (a batched dot_general just lowers to a per-head loop anyway).
    for h in range(h_blk):                                # static unroll over heads
        lo = h * head_dim
        hi = lo + head_dim

        # scores = q_h @ k_h^T  (contract head_dim; bf16 operands, f32 accumulation)
        s = lax.dot_general(q[:, lo:hi], k[:, lo:hi], (((1,), (1,)), ((), ())),
                            preferred_element_type=jnp.float32)        # (L, L) f32
        s = s + mask_b

        # numerically-stable softmax along keys; reciprocal goes to the EUP slot
        s = s - jnp.max(s, axis=-1, keepdims=True)
        e = jnp.exp(s)
        inv = pl.reciprocal(jnp.sum(e, axis=-1, keepdims=True), approx=True)
        p = e * inv                                                     # (L, L) f32

        # TODO(synk): attention-probs dropout omitted (eval-mode forward); training
        # parity would draw a keep-mask via pltpu.prng_seed / pltpu.prng_random_bits.
        if probs_ref is not None:
            probs_ref[0, h] = p.astype(probs_ref.dtype)

        # Write this head's context directly into its column slice (no concat temp);
        # the HBM writeback stays driven by the (1, L, hd_blk) out BlockSpec.
        ctx_ref[0, :, lo:hi] = jnp.dot(p.astype(jnp.bfloat16), v[:, lo:hi],
                                       preferred_element_type=jnp.float32
                                       ).astype(ctx_ref.dtype)


def _pick_head_block(num_heads, head_dim):
    # Smallest head block whose context slab width (h_blk*head_dim) is lane-dense
    # (multiple of 128); otherwise fall back to all heads (slab width == F).
    for h_blk in range(1, num_heads):
        if num_heads % h_blk == 0 and (h_blk * head_dim) % 128 == 0:
            return h_blk
    return num_heads


def bert_audio_self_attention(hidden_states, attention_mask, params, *,
                              num_heads, return_probs=True,
                              probs_dtype=jnp.bfloat16):
    """hidden_states: [B, T, S, F]; attention_mask: [B, T*S] additive (0 / -10000).

    Returns (context [B, T, S, F], attention_probs [B, num_heads, T*S, T*S] or None).
    """
    B, T, S, F_ = hidden_states.shape
    L = T * S
    assert F_ % num_heads == 0
    head_dim = F_ // num_heads
    h_blk = _pick_head_block(num_heads, head_dim)
    nhb = num_heads // h_blk
    hd_blk = h_blk * head_dim

    # bf16 activations / weights for the MXU; biases, mask and softmax stay in f32.
    x = hidden_states.reshape(B, L, F_).astype(jnp.bfloat16)
    mask = attention_mask.reshape(B, 1, L).astype(jnp.float32)

    # Per-head-block fused [Wq | Wk | Wv] slices: (nhb, F, 3*hd_blk), bf16.
    def w_blocks(w):   # w: (F, F) stored [in, out]
        return w.reshape(F_, nhb, hd_blk).transpose(1, 0, 2)

    wqkv = jnp.concatenate([w_blocks(params["w_q"]), w_blocks(params["w_k"]),
                            w_blocks(params["w_v"])], axis=-1).astype(jnp.bfloat16)

    def b_blocks(b):   # b: (1, F)
        return b.reshape(nhb, 1, hd_blk)

    bqkv = jnp.concatenate([b_blocks(params["b_q"]), b_blocks(params["b_k"]),
                            b_blocks(params["b_v"])], axis=-1).astype(jnp.float32)

    kernel = functools.partial(_self_attn_kernel, h_blk=h_blk, head_dim=head_dim,
                               scale=1.0 / math.sqrt(head_dim))

    out_shape = [jax.ShapeDtypeStruct((B, L, F_), hidden_states.dtype)]
    out_specs = [pl.BlockSpec((1, L, hd_blk), lambda b, h: (b, 0, h))]
    if return_probs:
        out_shape.append(jax.ShapeDtypeStruct((B, num_heads, L, L), probs_dtype))
        out_specs.append(pl.BlockSpec((1, h_blk, L, L), lambda b, h: (b, h, 0, 0)))

    # NOTE: at the demo sizes (F = L = 32) the output stores are sub-128-lane masked
    # stores; real BERT sizes (F=768, L a multiple of 128) are lane-dense.
    # x / mask keep a constant block index along the head axis, so Pallas does not
    # re-DMA them between consecutive head steps of the same batch row.  When
    # nhb == 1 the weight block is constant across the whole grid and could also
    # be single-buffered (pipeline_mode=pl.Buffered(1)) to save VMEM.
    outs = pl.pallas_call(
        kernel,
        out_shape=out_shape,
        grid_spec=pl.GridSpec(
            grid=(B, nhb),
            in_specs=[
                pl.BlockSpec((1, L, F_), lambda b, h: (b, 0, 0)),            # x rows
                pl.BlockSpec((1, F_, 3 * hd_blk), lambda b, h: (h, 0, 0)),   # W block
                pl.BlockSpec((1, 1, 3 * hd_blk), lambda b, h: (h, 0, 0)),    # bias block
                pl.BlockSpec((1, 1, L), lambda b, h: (b, 0, 0)),             # additive mask
            ],
            out_specs=out_specs,
        ),
        compiler_params=pltpu.CompilerParams(
            dimension_semantics=("parallel", "parallel")),
    )(x, wqkv, bqkv, mask)

    if return_probs:
        ctx, probs = outs
        return ctx.reshape(B, T, S, F_), probs
    (ctx,) = outs
    return ctx.reshape(B, T, S, F_), None


def init_params(key, a_hidden_size):
    """nn.Linear-style init; weights stored [in, out] (transposed from PyTorch)."""
    ks = jax.random.split(key, 6)
    scale = 1.0 / math.sqrt(a_hidden_size)
    u = lambda k, shape: jax.random.uniform(k, shape, jnp.float32, -scale, scale)
    return {
        "w_q": u(ks[0], (a_hidden_size, a_hidden_size)),
        "b_q": u(ks[1], (1, a_hidden_size)),
        "w_k": u(ks[2], (a_hidden_size, a_hidden_size)),
        "b_k": u(ks[3], (1, a_hidden_size)),
        "w_v": u(ks[4], (a_hidden_size, a_hidden_size)),
        "b_v": u(ks[5], (1, a_hidden_size)),
    }


def reference(hidden_states, attention_mask, params, num_heads):
    """Pure-JAX f32 replica of the PyTorch forward (eval mode) for correctness check."""
    B, T, S, F_ = hidden_states.shape
    L = T * S
    dh = F_ // num_heads
    x = hidden_states.reshape(B, L, F_)

    q = x @ params["w_q"] + params["b_q"][0]
    k = x @ params["w_k"] + params["b_k"][0]
    v = x @ params["w_v"] + params["b_v"][0]

    def split_heads(t):
        return t.reshape(B, L, num_heads, dh).transpose(0, 2, 1, 3)   # [B, nh, L, dh]

    q, k, v = split_heads(q), split_heads(k), split_heads(v)
    scores = jnp.einsum("bhqd,bhkd->bhqk", q, k) / math.sqrt(dh)
    scores = scores + attention_mask.reshape(B, 1, 1, L)
    probs = jax.nn.softmax(scores, axis=-1)
    ctx = jnp.einsum("bhqk,bhkd->bhqd", probs, v)
    ctx = ctx.transpose(0, 2, 1, 3).reshape(B, T, S, F_)
    return ctx, probs


if __name__ == "__main__":
    # Small shapes consistent with the module: hidden_states [B, T, S, a_hidden_size]
    B, T, S, H = 2, 4, 8, 32          # L = T*S = 32
    NUM_HEADS = 4                     # head_dim = 8

    key = jax.random.PRNGKey(0)
    kx, km, kp = jax.random.split(key, 3)

    x = jax.random.normal(kx, (B, T, S, H), jnp.float32)
    # additive attention mask: 0 for kept keys, -10000 for masked keys (~20% masked)
    keep = (jax.random.uniform(km, (B, T * S)) < 0.8).astype(jnp.float32)
    attention_mask = (1.0 - keep) * -10000.0

    params = init_params(kp, H)

    ctx, probs = bert_audio_self_attention(x, attention_mask, params,
                                           num_heads=NUM_HEADS)
    ctx, probs = jax.block_until_ready((ctx, probs))

    ref_ctx, ref_probs = reference(x, attention_mask, params, NUM_HEADS)

    assert ctx.shape == (B, T, S, H)
    assert probs.shape == (B, NUM_HEADS, T * S, T * S)
    # bf16 MXU operands + bf16 probs output -> compare against the f32 reference
    # with correspondingly loosened tolerances (expected quantization, not a bug).
    assert jnp.allclose(ctx, ref_ctx, atol=5e-2, rtol=5e-2), "context mismatch"
    assert jnp.allclose(probs.astype(jnp.float32), ref_probs,
                        atol=3e-2, rtol=3e-2), "probs mismatch"

    print("KERNEL_OK")
</pallas_src>

<mosaic_0001>
module attributes {stable_mosaic.version = 11 : i64} {
  func.func @_self_attn_kernel(%arg0: i32, %arg1: i32, %arg2: memref<1x32x32xbf16, #tpu.memory_space<vmem>>, %arg3: memref<1x32x96xbf16, #tpu.memory_space<vmem>>, %arg4: memref<1x1x96xf32, #tpu.memory_space<vmem>>, %arg5: memref<1x1x32xf32, #tpu.memory_space<vmem>>, %arg6: memref<1x32x32xf32, #tpu.memory_space<vmem>>, %arg7: memref<1x4x32x32xbf16, #tpu.memory_space<vmem>>) attributes {dimension_semantics = [#tpu.dimension_semantics<parallel>, #tpu.dimension_semantics<parallel>], iteration_bounds = array<i64: 2, 1>, scalar_prefetch = 0 : i64, scratch_operands = 0 : i64, tpu.core_type = #tpu.core_type<tc>, window_params = [{transform_indices = @transform_0, window_bounds = array<i64: 1, 32, 32>}, {transform_indices = @transform_1, window_bounds = array<i64: 1, 32, 96>}, {transform_indices = @transform_2, window_bounds = array<i64: 1, 1, 96>}, {transform_indices = @transform_3, window_bounds = array<i64: 1, 1, 32>}, {transform_indices = @transform_4, window_bounds = array<i64: 1, 32, 32>}, {transform_indices = @transform_5, window_bounds = array<i64: 1, 4, 32, 32>}]} {
    %c0 = arith.constant 0 : index
    %c0_0 = arith.constant 0 : index
    %c0_1 = arith.constant 0 : index
    %0 = vector.load %arg2[%c0, %c0_0, %c0_1] : memref<1x32x32xbf16, #tpu.memory_space<vmem>>, vector<1x32x32xbf16>
    %1 = vector.shape_cast %0 : vector<1x32x32xbf16> to vector<32x32xbf16>
    %c0_2 = arith.constant 0 : index
    %c0_3 = arith.constant 0 : index
    %c0_4 = arith.constant 0 : index
    %2 = vector.load %arg3[%c0_2, %c0_3, %c0_4] : memref<1x32x96xbf16, #tpu.memory_space<vmem>>, vector<1x32x96xbf16>
    %3 = vector.shape_cast %2 : vector<1x32x96xbf16> to vector<32x96xbf16>
    %cst = arith.constant dense<0.000000e+00> : vector<32x96xf32>
    %4 = tpu.matmul %1, %3, %cst {dimension_numbers = #tpu.dot_dimension_numbers<[1], [0], [0], [1], [0, 0, 1, 1], [], []>} : vector<32x32xbf16>, vector<32x96xbf16>, vector<32x96xf32> -> vector<32x96xf32>
    %c0_5 = arith.constant 0 : index
    %c0_6 = arith.constant 0 : index
    %c0_7 = arith.constant 0 : index
    %5 = vector.load %arg4[%c0_5, %c0_6, %c0_7] : memref<1x1x96xf32, #tpu.memory_space<vmem>>, vector<1x1x96xf32>
    %6 = vector.shape_cast %5 : vector<1x1x96xf32> to vector<1x96xf32>
    %7 = vector.broadcast %6 : vector<1x96xf32> to vector<32x96xf32>
    %8 = arith.addf %4, %7 : vector<32x96xf32>
    %9 = vector.extract_strided_slice %8 {offsets = [0, 0], sizes = [32, 32], strides = [1, 1]} : vector<32x96xf32> to vector<32x32xf32>
    %cst_8 = arith.constant 0.353553385 : f32
    %10 = vector.broadcast %cst_8 : f32 to vector<32x32xf32>
    %11 = arith.mulf %9, %10 : vector<32x32xf32>
    %12 = arith.truncf %11 : vector<32x32xf32> to vector<32x32xbf16>
    %13 = vector.extract_strided_slice %8 {offsets = [0, 32], sizes = [32, 32], strides = [1, 1]} : vector<32x96xf32> to vector<32x32xf32>
    %14 = arith.truncf %13 : vector<32x32xf32> to vector<32x32xbf16>
    %15 = vector.extract_strided_slice %8 {offsets = [0, 64], sizes = [32, 32], strides = [1, 1]} : vector<32x96xf32> to vector<32x32xf32>
    %16 = arith.truncf %15 : vector<32x32xf32> to vector<32x32xbf16>
    %c0_9 = arith.constant 0 : index
    %c0_10 = arith.constant 0 : index
    %c0_11 = arith.constant 0 : index
    %17 = vector.load %arg5[%c0_9, %c0_10, %c0_11] : memref<1x1x32xf32, #tpu.memory_space<vmem>>, vector<1x1x32xf32>
    %18 = vector.shape_cast %17 : vector<1x1x32xf32> to vector<1x32xf32>
    %19 = vector.shape_cast %18 : vector<1x32xf32> to vector<1x32xf32>
    %20 = vector.broadcast %19 : vector<1x32xf32> to vector<32x32xf32>
    %21 = vector.extract_strided_slice %12 {offsets = [0, 0], sizes = [32, 8], strides = [1, 1]} : vector<32x32xbf16> to vector<32x8xbf16>
    %22 = vector.extract_strided_slice %14 {offsets = [0, 0], sizes = [32, 8], strides = [1, 1]} : vector<32x32xbf16> to vector<32x8xbf16>
    %cst_12 = arith.constant dense<0.000000e+00> : vector<32x32xf32>
    %23 = tpu.matmul %21, %22, %cst_12 {dimension_numbers = #tpu.dot_dimension_numbers<[1], [1], [0], [0], [0, 0, 1, 0], [], []>} : vector<32x8xbf16>, vector<32x8xbf16>, vector<32x32xf32> -> vector<32x32xf32>
    %24 = arith.addf %23, %20 : vector<32x32xf32>
    %cst_13 = arith.constant dense<0xFF800000> : vector<32xf32>
    %25 = vector.multi_reduction <maximumf>, %24, %cst_13 [1] : vector<32x32xf32> to vector<32xf32>
    %26 = vector.shape_cast %25 : vector<32xf32> to vector<32x1xf32>
    %27 = vector.broadcast %26 : vector<32x1xf32> to vector<32x32xf32>
    %28 = arith.subf %24, %27 : vector<32x32xf32>
    %29 = math.exp %28 : vector<32x32xf32>
    %cst_14 = arith.constant dense<0.000000e+00> : vector<32xf32>
    %30 = vector.multi_reduction <add>, %29, %cst_14 [1] : vector<32x32xf32> to vector<32xf32>
    %31 = vector.shape_cast %30 : vector<32xf32> to vector<32x1xf32>
    %32 = tpu.reciprocal %31 {approx = true} : vector<32x1xf32> -> vector<32x1xf32>
    %33 = vector.broadcast %32 : vector<32x1xf32> to vector<32x32xf32>
    %34 = arith.mulf %29, %33 : vector<32x32xf32>
    %35 = arith.truncf %34 : vector<32x32xf32> to vector<32x32xbf16>
    %c0_15 = arith.constant 0 : index
    %c0_16 = arith.constant 0 : index
    %c0_17 = arith.constant 0 : index
    %c0_18 = arith.constant 0 : index
    %36 = vector.load %arg7[%c0_15, %c0_16, %c0_17, %c0_18] : memref<1x4x32x32xbf16, #tpu.memory_space<vmem>>, vector<1x1x32x32xbf16>
    %37 = vector.shape_cast %36 : vector<1x1x32x32xbf16> to vector<32x32xbf16>
    %38 = vector.shape_cast %35 : vector<32x32xbf16> to vector<1x1x32x32xbf16>
    tpu.vector_store %arg7[%c0_15, %c0_16, %c0_17, %c0_18], %38 {strides = array<i32>} : memref<1x4x32x32xbf16, #tpu.memory_space<vmem>>, vector<1x1x32x32xbf16>,
    %39 = arith.truncf %34 : vector<32x32xf32> to vector<32x32xbf16>
    %40 = vector.extract_strided_slice %16 {offsets = [0, 0], sizes = [32, 8], strides = [1, 1]} : vector<32x32xbf16> to vector<32x8xbf16>
    %cst_19 = arith.constant dense<0.000000e+00> : vector<32x8xf32>
    %41 = tpu.matmul %39, %40, %cst_19 {dimension_numbers = #tpu.dot_dimension_numbers<[1], [0], [0], [1], [0, 0, 1, 1], [], []>} : vector<32x32xbf16>, vector<32x8xbf16>, vector<32x8xf32> -> vector<32x8xf32>
    %c0_20 = arith.constant 0 : index
    %c0_21 = arith.constant 0 : index
    %c0_22 = arith.constant 0 : index
    %42 = vector.load %arg6[%c0_20, %c0_21, %c0_22] : memref<1x32x32xf32, #tpu.memory_space<vmem>>, vector<1x32x8xf32>
    %43 = vector.shape_cast %42 : vector<1x32x8xf32> to vector<32x8xf32>
    %44 = vector.shape_cast %41 : vector<32x8xf32> to vector<1x32x8xf32>
    tpu.vector_store %arg6[%c0_20, %c0_21, %c0_22], %44 {strides = array<i32>} : memref<1x32x32xf32, #tpu.memory_space<vmem>>, vector<1x32x8xf32>,
    %45 = vector.extract_strided_slice %12 {offsets = [0, 8], sizes = [32, 8], strides = [1, 1]} : vector<32x32xbf16> to vector<32x8xbf16>
    %46 = vector.extract_strided_slice %14 {offsets = [0, 8], sizes = [32, 8], strides = [1, 1]} : vector<32x32xbf16> to vector<32x8xbf16>
    %cst_23 = arith.constant dense<0.000000e+00> : vector<32x32xf32>
    %47 = tpu.matmul %45, %46, %cst_23 {dimension_numbers = #tpu.dot_dimension_numbers<[1], [1], [0], [0], [0, 0, 1, 0], [], []>} : vector<32x8xbf16>, vector<32x8xbf16>, vector<32x32xf32> -> vector<32x32xf32>
    %48 = arith.addf %47, %20 : vector<32x32xf32>
    %cst_24 = arith.constant dense<0xFF800000> : vector<32xf32>
    %49 = vector.multi_reduction <maximumf>, %48, %cst_24 [1] : vector<32x32xf32> to vector<32xf32>
    %50 = vector.shape_cast %49 : vector<32xf32> to vector<32x1xf32>
    %51 = vector.broadcast %50 : vector<32x1xf32> to vector<32x32xf32>
    %52 = arith.subf %48, %51 : vector<32x32xf32>
    %53 = math.exp %52 : vector<32x32xf32>
    %cst_25 = arith.constant dense<0.000000e+00> : vector<32xf32>
    %54 = vector.multi_reduction <add>, %53, %cst_25 [1] : vector<32x32xf32> to vector<32xf32>
    %55 = vector.shape_cast %54 : vector<32xf32> to vector<32x1xf32>
    %56 = tpu.reciprocal %55 {approx = true} : vector<32x1xf32> -> vector<32x1xf32>
    %57 = vector.broadcast %56 : vector<32x1xf32> to vector<32x32xf32>
    %58 = arith.mulf %53, %57 : vector<32x32xf32>
    %59 = arith.truncf %58 : vector<32x32xf32> to vector<32x32xbf16>
    %c0_26 = arith.constant 0 : index
    %c1 = arith.constant 1 : index
    %c0_27 = arith.constant 0 : index
    %c0_28 = arith.constant 0 : index
    %60 = vector.load %arg7[%c0_26, %c1, %c0_27, %c0_28] : memref<1x4x32x32xbf16, #tpu.memory_space<vmem>>, vector<1x1x32x32xbf16>
    %61 = vector.shape_cast %60 : vector<1x1x32x32xbf16> to vector<32x32xbf16>
    %62 = vector.shape_cast %59 : vector<32x32xbf16> to vector<1x1x32x32xbf16>
    tpu.vector_store %arg7[%c0_26, %c1, %c0_27, %c0_28], %62 {strides = array<i32>} : memref<1x4x32x32xbf16, #tpu.memory_space<vmem>>, vector<1x1x32x32xbf16>,
    %63 = arith.truncf %58 : vector<32x32xf32> to vector<32x32xbf16>
    %64 = vector.extract_strided_slice %16 {offsets = [0, 8], sizes = [32, 8], strides = [1, 1]} : vector<32x32xbf16> to vector<32x8xbf16>
    %cst_29 = arith.constant dense<0.000000e+00> : vector<32x8xf32>
    %65 = tpu.matmul %63, %64, %cst_29 {dimension_numbers = #tpu.dot_dimension_numbers<[1], [0], [0], [1], [0, 0, 1, 1], [], []>} : vector<32x32xbf16>, vector<32x8xbf16>, vector<32x8xf32> -> vector<32x8xf32>
    %c0_30 = arith.constant 0 : index
    %c0_31 = arith.constant 0 : index
    %c8 = arith.constant 8 : index
    %66 = vector.load %arg6[%c0_30, %c0_31, %c8] : memref<1x32x32xf32, #tpu.memory_space<vmem>>, vector<1x32x8xf32>
    %67 = vector.shape_cast %66 : vector<1x32x8xf32> to vector<32x8xf32>
    %68 = vector.shape_cast %65 : vector<32x8xf32> to vector<1x32x8xf32>
    tpu.vector_store %arg6[%c0_30, %c0_31, %c8], %68 {strides = array<i32>} : memref<1x32x32xf32, #tpu.memory_space<vmem>>, vector<1x32x8xf32>,
    %69 = vector.extract_strided_slice %12 {offsets = [0, 16], sizes = [32, 8], strides = [1, 1]} : vector<32x32xbf16> to vector<32x8xbf16>
    %70 = vector.extract_strided_slice %14 {offsets = [0, 16], sizes = [32, 8], strides = [1, 1]} : vector<32x32xbf16> to vector<32x8xbf16>
    %cst_32 = arith.constant dense<0.000000e+00> : vector<32x32xf32>
    %71 = tpu.matmul %69, %70, %cst_32 {dimension_numbers = #tpu.dot_dimension_numbers<[1], [1], [0], [0], [0, 0, 1, 0], [], []>} : vector<32x8xbf16>, vector<32x8xbf16>, vector<32x32xf32> -> vector<32x32xf32>
    %72 = arith.addf %71, %20 : vector<32x32xf32>
    %cst_33 = arith.constant dense<0xFF800000> : vector<32xf32>
    %73 = vector.multi_reduction <maximumf>, %72, %cst_33 [1] : vector<32x32xf32> to vector<32xf32>
    %74 = vector.shape_cast %73 : vector<32xf32> to vector<32x1xf32>
    %75 = vector.broadcast %74 : vector<32x1xf32> to vector<32x32xf32>
    %76 = arith.subf %72, %75 : vector<32x32xf32>
    %77 = math.exp %76 : vector<32x32xf32>
    %cst_34 = arith.constant dense<0.000000e+00> : vector<32xf32>
    %78 = vector.multi_reduction <add>, %77, %cst_34 [1] : vector<32x32xf32> to vector<32xf32>
    %79 = vector.shape_cast %78 : vector<32xf32> to vector<32x1xf32>
    %80 = tpu.reciprocal %79 {approx = true} : vector<32x1xf32> -> vector<32x1xf32>
    %81 = vector.broadcast %80 : vector<32x1xf32> to vector<32x32xf32>
    %82 = arith.mulf %77, %81 : vector<32x32xf32>
    %83 = arith.truncf %82 : vector<32x32xf32> to vector<32x32xbf16>
    %c0_35 = arith.constant 0 : index
    %c2 = arith.constant 2 : index
    %c0_36 = arith.constant 0 : index
    %c0_37 = arith.constant 0 : index
    %84 = vector.load %arg7[%c0_35, %c2, %c0_36, %c0_37] : memref<1x4x32x32xbf16, #tpu.memory_space<vmem>>, vector<1x1x32x32xbf16>
    %85 = vector.shape_cast %84 : vector<1x1x32x32xbf16> to vector<32x32xbf16>
    %86 = vector.shape_cast %83 : vector<32x32xbf16> to vector<1x1x32x32xbf16>
    tpu.vector_store %arg7[%c0_35, %c2, %c0_36, %c0_37], %86 {strides = array<i32>} : memref<1x4x32x32xbf16, #tpu.memory_space<vmem>>, vector<1x1x32x32xbf16>,
    %87 = arith.truncf %82 : vector<32x32xf32> to vector<32x32xbf16>
    %88 = vector.extract_strided_slice %16 {offsets = [0, 16], sizes = [32, 8], strides = [1, 1]} : vector<32x32xbf16> to vector<32x8xbf16>
    %cst_38 = arith.constant dense<0.000000e+00> : vector<32x8xf32>
    %89 = tpu.matmul %87, %88, %cst_38 {dimension_numbers = #tpu.dot_dimension_numbers<[1], [0], [0], [1], [0, 0, 1, 1], [], []>} : vector<32x32xbf16>, vector<32x8xbf16>, vector<32x8xf32> -> vector<32x8xf32>
    %c0_39 = arith.constant 0 : index
    %c0_40 = arith.constant 0 : index
    %c16 = arith.constant 16 : index
    %90 = vector.load %arg6[%c0_39, %c0_40, %c16] : memref<1x32x32xf32, #tpu.memory_space<vmem>>, vector<1x32x8xf32>
    %91 = vector.shape_cast %90 : vector<1x32x8xf32> to vector<32x8xf32>
    %92 = vector.shape_cast %89 : vector<32x8xf32> to vector<1x32x8xf32>
    tpu.vector_store %arg6[%c0_39, %c0_40, %c16], %92 {strides = array<i32>} : memref<1x32x32xf32, #tpu.memory_space<vmem>>, vector<1x32x8xf32>,
    %93 = vector.extract_strided_slice %12 {offsets = [0, 24], sizes = [32, 8], strides = [1, 1]} : vector<32x32xbf16> to vector<32x8xbf16>
    %94 = vector.extract_strided_slice %14 {offsets = [0, 24], sizes = [32, 8], strides = [1, 1]} : vector<32x32xbf16> to vector<32x8xbf16>
    %cst_41 = arith.constant dense<0.000000e+00> : vector<32x32xf32>
    %95 = tpu.matmul %93, %94, %cst_41 {dimension_numbers = #tpu.dot_dimension_numbers<[1], [1], [0], [0], [0, 0, 1, 0], [], []>} : vector<32x8xbf16>, vector<32x8xbf16>, vector<32x32xf32> -> vector<32x32xf32>
    %96 = arith.addf %95, %20 : vector<32x32xf32>
    %cst_42 = arith.constant dense<0xFF800000> : vector<32xf32>
    %97 = vector.multi_reduction <maximumf>, %96, %cst_42 [1] : vector<32x32xf32> to vector<32xf32>
    %98 = vector.shape_cast %97 : vector<32xf32> to vector<32x1xf32>
    %99 = vector.broadcast %98 : vector<32x1xf32> to vector<32x32xf32>
    %100 = arith.subf %96, %99 : vector<32x32xf32>
    %101 = math.exp %100 : vector<32x32xf32>
    %cst_43 = arith.constant dense<0.000000e+00> : vector<32xf32>
    %102 = vector.multi_reduction <add>, %101, %cst_43 [1] : vector<32x32xf32> to vector<32xf32>
    %103 = vector.shape_cast %102 : vector<32xf32> to vector<32x1xf32>
    %104 = tpu.reciprocal %103 {approx = true} : vector<32x1xf32> -> vector<32x1xf32>
    %105 = vector.broadcast %104 : vector<32x1xf32> to vector<32x32xf32>
    %106 = arith.mulf %101, %105 : vector<32x32xf32>
    %107 = arith.truncf %106 : vector<32x32xf32> to vector<32x32xbf16>
    %c0_44 = arith.constant 0 : index
    %c3 = arith.constant 3 : index
    %c0_45 = arith.constant 0 : index
    %c0_46 = arith.constant 0 : index
    %108 = vector.load %arg7[%c0_44, %c3, %c0_45, %c0_46] : memref<1x4x32x32xbf16, #tpu.memory_space<vmem>>, vector<1x1x32x32xbf16>
    %109 = vector.shape_cast %108 : vector<1x1x32x32xbf16> to vector<32x32xbf16>
    %110 = vector.shape_cast %107 : vector<32x32xbf16> to vector<1x1x32x32xbf16>
    tpu.vector_store %arg7[%c0_44, %c3, %c0_45, %c0_46], %110 {strides = array<i32>} : memref<1x4x32x32xbf16, #tpu.memory_space<vmem>>, vector<1x1x32x32xbf16>,
    %111 = arith.truncf %106 : vector<32x32xf32> to vector<32x32xbf16>
    %112 = vector.extract_strided_slice %16 {offsets = [0, 24], sizes = [32, 8], strides = [1, 1]} : vector<32x32xbf16> to vector<32x8xbf16>
    %cst_47 = arith.constant dense<0.000000e+00> : vector<32x8xf32>
    %113 = tpu.matmul %111, %112, %cst_47 {dimension_numbers = #tpu.dot_dimension_numbers<[1], [0], [0], [1], [0, 0, 1, 1], [], []>} : vector<32x32xbf16>, vector<32x8xbf16>, vector<32x8xf32> -> vector<32x8xf32>
    %c0_48 = arith.constant 0 : index
    %c0_49 = arith.constant 0 : index
    %c24 = arith.constant 24 : index
    %114 = vector.load %arg6[%c0_48, %c0_49, %c24] : memref<1x32x32xf32, #tpu.memory_space<vmem>>, vector<1x32x8xf32>
    %115 = vector.shape_cast %114 : vector<1x32x8xf32> to vector<32x8xf32>
    %116 = vector.shape_cast %113 : vector<32x8xf32> to vector<1x32x8xf32>
    tpu.vector_store %arg6[%c0_48, %c0_49, %c24], %116 {strides = array<i32>} : memref<1x32x32xf32, #tpu.memory_space<vmem>>, vector<1x32x8xf32>,
    return
  }
  func.func @transform_0(%arg0: i32, %arg1: i32) -> (i32, i32, i32) {
    %c0_i32 = arith.constant 0 : i32
    %c0_i32_0 = arith.constant 0 : i32
    %c0_i32_1 = arith.constant 0 : i32
    return %arg0, %c0_i32, %c0_i32_0 : i32, i32, i32
  }
  func.func @transform_1(%arg0: i32, %arg1: i32) -> (i32, i32, i32) {
    %c0_i32 = arith.constant 0 : i32
    %c0_i32_0 = arith.constant 0 : i32
    %c0_i32_1 = arith.constant 0 : i32
    return %arg1, %c0_i32, %c0_i32_0 : i32, i32, i32
  }
  func.func @transform_2(%arg0: i32, %arg1: i32) -> (i32, i32, i32) {
    %c0_i32 = arith.constant 0 : i32
    %c0_i32_0 = arith.constant 0 : i32
    %c0_i32_1 = arith.constant 0 : i32
    return %arg1, %c0_i32, %c0_i32_0 : i32, i32, i32
  }
  func.func @transform_3(%arg0: i32, %arg1: i32) -> (i32, i32, i32) {
    %c0_i32 = arith.constant 0 : i32
    %c0_i32_0 = arith.constant 0 : i32
    %c0_i32_1 = arith.constant 0 : i32
    return %arg0, %c0_i32, %c0_i32_0 : i32, i32, i32
  }
  func.func @transform_4(%arg0: i32, %arg1: i32) -> (i32, i32, i32) {
    %c0_i32 = arith.constant 0 : i32
    %c0_i32_0 = arith.constant 0 : i32
    return %arg0, %c0_i32, %arg1 : i32, i32, i32
  }
  func.func @transform_5(%arg0: i32, %arg1: i32) -> (i32, i32, i32, i32) {
    %c0_i32 = arith.constant 0 : i32
    %c0_i32_0 = arith.constant 0 : i32
    %c0_i32_1 = arith.constant 0 : i32
    return %arg0, %arg1, %c0_i32, %c0_i32_0 : i32, i32, i32, i32
  }
}

</mosaic_0001>

<llo_original>
// kernel: tpu_custom_call.1
$region0: #{tpu_custom_call.1}
  #allocation0 [shape = 'u32[]', space=smem, size = 0x4, offset = 0x4, fixed_abs, tag = 'smem constant byte address 0x4 - core index']
  #allocation1 [shape = 'u32[144,128]{1,0:T(1,128)}', space=vmem, size = 0x12000, scoped, tag = 'internal scratch']
  %s0 = inlined_call_operand.hbm [shape: bf16[2,32,32], index: 0, kind: input, shape index: {}]
  %s1 = inlined_call_operand.hbm [shape: bf16[1,32,96], index: 1, kind: input, shape index: {}]
  %s2 = inlined_call_operand.vmem [shape: f32[1,1,96], index: 2, kind: input, shape index: {}]
  %s3 = inlined_call_operand.vmem [shape: f32[2,1,32], index: 3, kind: input, shape index: {}]
  %s4 = inlined_call_operand.hbm [shape: f32[2,32,32], index: 4, kind: output, shape index: {0}]
  %s5 = inlined_call_operand.hbm [shape: bf16[2,4,32,32], index: 5, kind: output, shape index: {1}]
  %6 = xla_tuple %s4, %s5
  %s7 = sld [smem:[#allocation0]]
  $region65: #{tpu_custom_call.1} parent=0
    _
  %s9 = ssub.s32 1, %s7
  %s10 = scalar_select 0, %s9, %s7
  $region1: #{tpu_custom_call.1} parent=0
    #allocation2 [shape = 'u8[16384]{0}', space=vmem, size = 0x4000, scoped, tag = 'input window, operand 0']
    #allocation3 [shape = 's32[2]{0}', space=sflag, size = 0x8, scoped, tag = 'scoped memory for tpu_custom_call.1']
    #allocation4 [shape = 's32[2]{0}', space=sflag, size = 0x8, scoped, tag = 'scoped memory for tpu_custom_call.1']
    #allocation5 [shape = 'u8[8192]{0}', space=vmem, size = 0x2000, scoped, tag = 'input window, operand 1, single buffered']
    #allocation6 [shape = 's32[1]{0}', space=sflag, size = 0x4, scoped, tag = 'scoped memory for tpu_custom_call.1']
    #allocation7 [shape = 'u8[32768]{0}', space=vmem, size = 0x8000, scoped, tag = 'output window, operand 0']
    #allocation8 [shape = 'u8[65536]{0}', space=vmem, size = 0x10000, scoped, tag = 'output window, operand 1']
    #allocation9 [shape = 's32[2]{0}', space=sflag, size = 0x8, scoped, tag = 'scoped memory for tpu_custom_call.1']
    %11 = vsyncpa [#allocation3], 0
    %s12 = scalar_lea.sflag [#allocation3], 1
    %13 = vsyncpa %s12, 0
    %14 = vsyncpa [#allocation6], 0
    %15 = vsyncpa [#allocation4], 0
    %s16 = scalar_lea.sflag [#allocation4], 1
    %17 = vsyncpa %s16, 0
    %18 = vsyncpa [#allocation9], 0
    %s19 = scalar_lea.sflag [#allocation9], 1
    %20 = vsyncpa %s19, 0
    loop: start=0, step=1, limit=4
    $region2: #{tpu_custom_call.1} parent=1 // loop_pre_header
      _
    $region3: #{tpu_custom_call.1} parent=1 // loop_header
      %s22 = sphi 0, %s26
      %p23 = scmp.ge.s32.totalorder %s22, 4
      %s29 = sphi 0, %s41
      %s30 = sphi 0, %s37
      %s31 = sphi 0, %s29
      %s32 = sphi 0, %s30
      %s33 = sphi 0, %s31
      %s34 = sphi 0, %s32
      %s44 = sphi 0, %s46
      %s47 = sphi 0, %s44
      %s48 = sphi 0, %s47
      %s64 = sphi 0, %s48
      %s70 = sphi 0, %s72
      %s73 = sphi 0, %s70
      %s74 = sphi 0, %s73
      %s90 = sphi 0, %s74
      %s96 = sphi 0, %s98
      %s99 = sphi 0, %s96
      %s100 = sphi 0, %s99
      %s116 = sphi 0, %s100
      %s122 = sphi 0, %s124
      %s125 = sphi 0, %s122
      %s126 = sphi 0, %s125
      %s142 = sphi 0, %s126
      %s150 = sphi 0, %s152
      %s153 = sphi 0, %s150
      %s154 = sphi 0, %s153
      %s170 = sphi 0, %s154
      %s178 = sphi 0, %s180
      %s181 = sphi 0, %s178
      %s182 = sphi 0, %s181
      %s198 = sphi 0, %s182
    $region4: #{tpu_custom_call.1} parent=1 // loop_header_branch
      %25 = sbr.rel (%p23) target = $region8
    $region5: #{tpu_custom_call.1} parent=1 // loop_body
      %s27 = ssub.s32 %s22, 1
      %s28 = ssub.s32 %s22, 2
      %s35 = sadd.s32 1, %s30
      %p36 = scmp.ge.s32.totalorder %s35, 1
      %s37 = scalar_select %p36, 0, %s35
      %s38 = sadd.s32 1, %s29
      %s39 = scalar_select %p36, %s38, %s29
      %p40 = scmp.ge.s32.totalorder %s39, 2
      %s41 = scalar_select %p40, 0, %s39
      %s42 = ssub.s32 %s29, %s41
      %p43 = scmp.eq.s32.totalorder %s42, 0
      %s45 = sadd.s32 %s44, 1
      %s46 = scalar_select %p43, %s44, %s45
      %p49 = pneg %p43
      %p50 = scmp.eq.s32.totalorder %s22, 1
      %p51 = por %p49, %p50
      %p52 = scmp.ne.s32.totalorder %s44, %s47
      %p53 = scmp.eq.s32.totalorder %s22, 0
      %p54 = por %p52, %p53
      %p55 = scmp.ne.s32.totalorder %s44, %s47
      %p56 = scmp.eq.s32.totalorder %s27, 1
      %p57 = por %p55, %p56
      %p58 = scmp.ne.s32.totalorder %s47, %s48
      %p59 = scmp.eq.s32.totalorder %s27, 0
      %p60 = por %p58, %p59
      %p61 = scmp.ne.s32.totalorder %s47, %s48
      %p62 = scmp.eq.s32.totalorder %s28, 1
      %p63 = por %p61, %p62
      %p65 = scmp.ne.s32.totalorder %s48, %s64
      %p66 = scmp.eq.s32.totalorder %s28, 0
      %p67 = por %p65, %p66
      %s68 = ssub.s32 %s30, %s37
      %p69 = scmp.eq.s32.totalorder %s68, 0
      %s71 = sadd.s32 %s70, 1
      %s72 = scalar_select %p69, %s70, %s71
      %p75 = pneg %p69
      %p76 = scmp.eq.s32.totalorder %s22, 1
      %p77 = por %p75, %p76
      %p78 = scmp.ne.s32.totalorder %s70, %s73
      %p79 = scmp.eq.s32.totalorder %s22, 0
      %p80 = por %p78, %p79
      %p81 = scmp.ne.s32.totalorder %s70, %s73
      %p82 = scmp.eq.s32.totalorder %s27, 1
      %p83 = por %p81, %p82
      %p84 = scmp.ne.s32.totalorder %s73, %s74
      %p85 = scmp.eq.s32.totalorder %s27, 0
      %p86 = por %p84, %p85
      %p87 = scmp.ne.s32.totalorder %s73, %s74
      %p88 = scmp.eq.s32.totalorder %s28, 1
      %p89 = por %p87, %p88
      %p91 = scmp.ne.s32.totalorder %s74, %s90
      %p92 = scmp.eq.s32.totalorder %s28, 0
      %p93 = por %p91, %p92
      %s94 = ssub.s32 %s30, %s37
      %p95 = scmp.eq.s32.totalorder %s94, 0
      %s97 = sadd.s32 %s96, 1
      %s98 = scalar_select %p95, %s96, %s97
      %p101 = pneg %p95
      %p102 = scmp.eq.s32.totalorder %s22, 1
      %p103 = por %p101, %p102
      %p104 = scmp.ne.s32.totalorder %s96, %s99
      %p105 = scmp.eq.s32.totalorder %s22, 0
      %p106 = por %p104, %p105
      %p107 = scmp.ne.s32.totalorder %s96, %s99
      %p108 = scmp.eq.s32.totalorder %s27, 1
      %p109 = por %p107, %p108
      %p110 = scmp.ne.s32.totalorder %s99, %s100
      %p111 = scmp.eq.s32.totalorder %s27, 0
      %p112 = por %p110, %p111
      %p113 = scmp.ne.s32.totalorder %s99, %s100
      %p114 = scmp.eq.s32.totalorder %s28, 1
      %p115 = por %p113, %p114
      %p117 = scmp.ne.s32.totalorder %s100, %s116
      %p118 = scmp.eq.s32.totalorder %s28, 0
      %p119 = por %p117, %p118
      %s120 = ssub.s32 %s29, %s41
      %p121 = scmp.eq.s32.totalorder %s120, 0
      %s123 = sadd.s32 %s122, 1
      %s124 = scalar_select %p121, %s122, %s123
      %p127 = pneg %p121
      %p128 = scmp.eq.s32.totalorder %s22, 1
      %p129 = por %p127, %p128
      %p130 = scmp.ne.s32.totalorder %s122, %s125
      %p131 = scmp.eq.s32.totalorder %s22, 0
      %p132 = por %p130, %p131
      %p133 = scmp.ne.s32.totalorder %s122, %s125
      %p134 = scmp.eq.s32.totalorder %s27, 1
      %p135 = por %p133, %p134
      %p136 = scmp.ne.s32.totalorder %s125, %s126
      %p137 = scmp.eq.s32.totalorder %s27, 0
      %p138 = por %p136, %p137
      %p139 = scmp.ne.s32.totalorder %s125, %s126
      %p140 = scmp.eq.s32.totalorder %s28, 1
      %p141 = por %p139, %p140
      %p143 = scmp.ne.s32.totalorder %s126, %s142
      %p144 = scmp.eq.s32.totalorder %s28, 0
      %p145 = por %p143, %p144
      %s146 = ssub.s32 %s29, %s41
      %s147 = ssub.s32 %s30, %s37
      %s148 = sor.u32 %s146, %s147
      %p149 = scmp.eq.s32.totalorder %s148, 0
      %s151 = sadd.s32 %s150, 1
      %s152 = scalar_select %p149, %s150, %s151
      %p155 = pneg %p149
      %p156 = scmp.eq.s32.totalorder %s22, 1
      %p157 = por %p155, %p156
      %p158 = scmp.ne.s32.totalorder %s150, %s153
      %p159 = scmp.eq.s32.totalorder %s22, 0
      %p160 = por %p158, %p159
      %p161 = scmp.ne.s32.totalorder %s150, %s153
      %p162 = scmp.eq.s32.totalorder %s27, 1
      %p163 = por %p161, %p162
      %p164 = scmp.ne.s32.totalorder %s153, %s154
      %p165 = scmp.eq.s32.totalorder %s27, 0
      %p166 = por %p164, %p165
      %p167 = scmp.ne.s32.totalorder %s153, %s154
      %p168 = scmp.eq.s32.totalorder %s28, 1
      %p169 = por %p167, %p168
      %p171 = scmp.ne.s32.totalorder %s154, %s170
      %p172 = scmp.eq.s32.totalorder %s28, 0
      %p173 = por %p171, %p172
      %s174 = ssub.s32 %s29, %s41
      %s175 = ssub.s32 %s30, %s37
      %s176 = sor.u32 %s174, %s175
      %p177 = scmp.eq.s32.totalorder %s176, 0
      %s179 = sadd.s32 %s178, 1
      %s180 = scalar_select %p177, %s178, %s179
      %p183 = pneg %p177
      %p184 = scmp.eq.s32.totalorder %s22, 1
      %p185 = por %p183, %p184
      %p186 = scmp.ne.s32.totalorder %s178, %s181
      %p187 = scmp.eq.s32.totalorder %s22, 0
      %p188 = por %p186, %p187
      %p189 = scmp.ne.s32.totalorder %s178, %s181
      %p190 = scmp.eq.s32.totalorder %s27, 1
      %p191 = por %p189, %p190
      %p192 = scmp.ne.s32.totalorder %s181, %s182
      %p193 = scmp.eq.s32.totalorder %s27, 0
      %p194 = por %p192, %p193
      %p195 = scmp.ne.s32.totalorder %s181, %s182
      %p196 = scmp.eq.s32.totalorder %s28, 1
      %p197 = por %p195, %p196
      %p199 = scmp.ne.s32.totalorder %s182, %s198
      %p200 = scmp.eq.s32.totalorder %s28, 0
      %p201 = por %p199, %p200
      %p202 = scmp.le.s32.totalorder 1, %s22
      %p203 = scmp.lt.s32.totalorder %s22, 3
      %p204 = pnand %p202, %p203
      %p205 = pneg %p204
      // Predicated region
      $region9: #{tpu_custom_call.1} parent=5 // pred_check
        _
      $region10: #{tpu_custom_call.1} parent=5 // pred_check_branch
        %207 = sbr.rel (%p204) target = $region12
      $region11: #{tpu_custom_call.1} parent=5 // pred_region
        %s208 = ssub.s32 %s22, 1
        // Predicated region
        $region13: #{tpu_custom_call.1} parent=11 // pred_check
          %p209 = pneg %p86
        $region14: #{tpu_custom_call.1} parent=11 // pred_check_branch
          %211 = sbr.rel (%p209) target = $region16
        $region15: #{tpu_custom_call.1} parent=11 // pred_region
          %s213 = ssub.s32 256, 256
          %214 = vsyncadd [#allocation6], %s213
          %s215 = smul.addr %s32, 4
          %s216 = smul.addr %s215, 64
          %s217 = scalar_lea.hbm %s1, %s216
          %s218 = sshll.u32 [#allocation5], 4
          %s219 = int_to_ptr.vmem [resolvable:$true] %s218
          %224 = dma.hbm_to_vmem [thread:$0]  %s217, 256, %s219, [#allocation6], 64, 64, 4
        $region16: #{tpu_custom_call.1} parent=11 // pred_fallthru
          _
        // Predicated region
        $region17: #{tpu_custom_call.1} parent=11 // pred_check
          %p225 = pneg %p112
        $region18: #{tpu_custom_call.1} parent=11 // pred_check_branch
          %227 = sbr.rel (%p225) target = $region20
        $region19: #{tpu_custom_call.1} parent=11 // pred_region
          %p228 = scmp.lt.s32.totalorder %s32, 0
          %s229 = scalar_select %p228, %s32, 0
          %s230 = scalar_lea.vmem %s2, %s229
        $region20: #{tpu_custom_call.1} parent=11 // pred_fallthru
          _
      $region12: #{tpu_custom_call.1} parent=5 // pred_fallthru
        _
      %p231 = scmp.lt.s32.totalorder %s22, 2
      // Predicated region
      $region21: #{tpu_custom_call.1} parent=5 // pred_check
        %p232 = pneg %p231
      $region22: #{tpu_custom_call.1} parent=5 // pred_check_branch
        %234 = sbr.rel (%p232) target = $region24
      $region23: #{tpu_custom_call.1} parent=5 // pred_region
        // Predicated region
        $region25: #{tpu_custom_call.1} parent=23 // pred_check
          %p235 = pneg %p54
        $region26: #{tpu_custom_call.1} parent=23 // pred_check_branch
          %237 = sbr.rel (%p235) target = $region28
        $region27: #{tpu_custom_call.1} parent=23 // pred_region
          %s238 = sand.u32 %s44, 1
          %s239 = scalar_lea.sflag [#allocation3], %s238
          %s240 = sand.u32 %s44, 1
          %s241 = smul.addr %s240, 16
          %s242 = scalar_lea.vmem [#allocation2], %s241
          %s244 = ssub.s32 256, 256
          %245 = vsyncadd %s239, %s244
          %s246 = smul.addr %s29, 4
          %s247 = smul.addr %s246, 64
          %s248 = scalar_lea.hbm %s0, %s247
          %s249 = sshll.u32 %s242, 4
          %s250 = int_to_ptr.vmem [resolvable:$true] %s249
          %255 = dma.hbm_to_vmem [thread:$0]  %s248, 256, %s250, %s239, 64, 64, 4
        $region28: #{tpu_custom_call.1} parent=23 // pred_fallthru
          _
        // Predicated region
        $region29: #{tpu_custom_call.1} parent=23 // pred_check
          %p256 = pneg %p132
        $region30: #{tpu_custom_call.1} parent=23 // pred_check_branch
          %258 = sbr.rel (%p256) target = $region32
        $region31: #{tpu_custom_call.1} parent=23 // pred_region
          %p259 = scmp.lt.s32.totalorder %s29, 1
          %s260 = scalar_select %p259, %s29, 1
          %s261 = scalar_lea.vmem %s3, %s260
        $region32: #{tpu_custom_call.1} parent=23 // pred_fallthru
          _
      $region24: #{tpu_custom_call.1} parent=5 // pred_fallthru
        _
      %p262 = scmp.le.s32.totalorder 1, %s22
      %p263 = scmp.lt.s32.totalorder %s22, 3
      %p264 = pnand %p262, %p263
      %p265 = pneg %p264
      // Predicated region
      $region33: #{tpu_custom_call.1} parent=5 // pred_check
        _
      $region34: #{tpu_custom_call.1} parent=5 // pred_check_branch
        %267 = sbr.rel (%p264) target = $region36
      $region35: #{tpu_custom_call.1} parent=5 // pred_region
        %s268 = ssub.s32 %s22, 1
        %s269 = sand.u32 %s47, 1
        %s270 = scalar_lea.sflag [#allocation3], %s269
        %s271 = sand.u32 %s47, 1
        %s272 = smul.addr %s271, 16
        %s273 = scalar_lea.vmem [#allocation2], %s272
        // Predicated region
        $region37: #{tpu_custom_call.1} parent=35 // pred_check
          %p274 = pneg %p60
        $region38: #{tpu_custom_call.1} parent=35 // pred_check_branch
          %276 = sbr.rel (%p274) target = $region40
        $region39: #{tpu_custom_call.1} parent=35 // pred_region
          %277 = dma.done %s270, 256
        $region40: #{tpu_custom_call.1} parent=35 // pred_fallthru
          _
        // Predicated region
        $region41: #{tpu_custom_call.1} parent=35 // pred_check
          %p278 = pneg %p86
        $region42: #{tpu_custom_call.1} parent=35 // pred_check_branch
          %280 = sbr.rel (%p278) target = $region44
        $region43: #{tpu_custom_call.1} parent=35 // pred_region
          %281 = dma.done [#allocation6], 256
        $region44: #{tpu_custom_call.1} parent=35 // pred_fallthru
          _
        %s282 = sand.u32 %s47, 1
        %s283 = scalar_lea.sflag [#allocation3], %s282
        %s284 = sand.u32 %s47, 1
        %s285 = smul.addr %s284, 16
        %s286 = scalar_lea.vmem [#allocation2], %s285
        %p287 = pneg %p60
        %p288 = pneg %p57
        %p289 = pneg %p86
        %p290 = pneg %p83
        %p291 = scmp.lt.s32.totalorder %s32, 0
        %s292 = scalar_select %p291, %s32, 0
        %s293 = scalar_lea.vmem %s2, %s292
        %p294 = pneg %p112
        %p295 = pneg %p109
        %p296 = scmp.lt.s32.totalorder %s31, 1
        %s297 = scalar_select %p296, %s31, 1
        %s298 = scalar_lea.vmem %s3, %s297
        %p299 = pneg %p138
        %p300 = pneg %p135
        %p301 = pneg %p166
        %p302 = pneg %p163
        %s303 = sand.u32 %s153, 1
        %s304 = scalar_lea.sflag [#allocation4], %s303
        %s305 = sand.u32 %s153, 1
        %s306 = smul.addr %s305, 32
        %s307 = scalar_lea.vmem [#allocation7], %s306
        %p308 = pneg %p194
        %p309 = pneg %p191
        %s310 = sand.u32 %s181, 1
        %s311 = scalar_lea.sflag [#allocation9], %s310
        %s312 = sand.u32 %s181, 1
        %s313 = smul.addr %s312, 64
        %s314 = scalar_lea.vmem [#allocation8], %s313
        %p315 = scmp.lt.s32.totalorder %s32, 0
        %s316 = scalar_select %p315, %s32, 0
        %s317 = scalar_lea.vmem %s2, %s316
        %p318 = scmp.lt.s32.totalorder %s31, 1
        %s319 = scalar_select %p318, %s31, 1
        %s320 = scalar_lea.vmem %s3, %s319
        %s321 = smul.u32 4, %s32
        %v323 = vld [vmem:[%s273] sm:$0xf]
        %v324 = vld [vmem:[%s273 + $0x4] sm:$0xf]
        %v325 = vld [vmem:[%s273 + $0x8] sm:$0xf]
        %v326 = vld [vmem:[%s273 + $0xc] sm:$0xf]
        %v327 = vld [vmem:[#allocation5] sm:$0xf]
        %v328 = vld [vmem:[#allocation5 + $0x4] sm:$0xf]
        %v329 = vld [vmem:[#allocation5 + $0x8] sm:$0xf]
        %v330 = vld [vmem:[#allocation5 + $0xc] sm:$0xf]
        %v331 = vld [vmem:[%s317] sm:$0x1]
        %v333 = vlaneseq
        %v334 = vshrl.u32 %v333, 7
        %v335 = vsub.s32 0, %v334
        %v336 = vrot.slane %v331, %v335
        %v342 = vunpack.c.l.b16 %v323
        %v343 = vunpack.c.l.b16 %v324
        %v344 = vunpack.c.l.b16 %v325
        %v345 = vunpack.c.l.b16 %v326
        %v346 = vpack.c.b16 %v343, %v342
        %v347 = vpack.c.b16 %v345, %v344
        %v352 = vunpack.c.l.b16 %v327
        %v353 = vunpack.c.l.b16 %v328
        %v354 = vunpack.c.l.b16 %v329
        %v355 = vunpack.c.l.b16 %v330
        %v356 = vpack.c.b16 %v353, %v352
        %v357 = vpack.c.b16 %v355, %v354
        %vm360 = vcmask 261120
        %v362 = vsel %vm360, %v346, 0
        %v365 = vsel %vm360, %v347, 0
        %367 = vmatprep.subr.bf16.mxu0 0
        %368 = vmatpush1.bf16.msra.mxu0 0
        %369 = vmatprep.subr.bf16.mxu0 0
        %370 = vmatpush1.bf16.msra.mxu0 0
        %371 = vmatprep.subr.bf16.mxu0 0
        %372 = vmatpush1.bf16.msra.mxu0 0
        %373 = vmatprep.subr.bf16.mxu0 0
        %374 = vmatpush1.bf16.msra.mxu0 0
        %375 = vmatprep.subr.bf16.mxu0 0
        %376 = vmatpush1.bf16.msra.mxu0 0
        %377 = vmatprep.subr.bf16.mxu0 0
        %378 = vmatpush1.bf16.msra.mxu0 0
        %379 = vmatprep.subr.bf16.mxu0 0
        %380 = vmatpush1.bf16.msra.mxu0 %v357
        %381 = vmatprep.subr.bf16.mxu0 0
        %382 = vmatpush1.bf16.msra.mxu0 %v356
        %383 = vmatprep.subr.bf16.mxu0 0
        %384 = vmatpush2.bf16.msra.mxu0 0
        %385 = vmatprep.subr.bf16.mxu0 0
        %386 = vmatpush2.bf16.msra.mxu0 0
        %387 = vmatprep.subr.bf16.mxu0 0
        %388 = vmatpush2.bf16.msra.mxu0 0
        %389 = vmatprep.subr.bf16.mxu0 0
        %390 = vmatpush2.bf16.msra.mxu0 0
        %391 = vmatprep.subr.bf16.mxu0 0
        %392 = vmatpush2.bf16.msra.mxu0 0
        %393 = vmatprep.subr.bf16.mxu0 0
        %394 = vmatpush2.bf16.msra.mxu0 0
        %395 = vmatprep.subr.bf16.mxu0 0
        %396 = vmatpush2.bf16.msra.mxu0 0
        %397 = vmatprep.subr.bf16.mxu0 0
        %398 = vmatpush2.bf16.msra.mxu0 0
        %399 = vmatprep.mubr.bf16.mxu0 0
        %400 = vmatmul.mubr.bf16.gmra.mxu0 %v362
        %v401 = vpop.f32.mrf.mxu0
        %v402 = vadd.f32 %v336, %v401
        %v403 = vpop.f32.mrf.mxu0
        %v404 = vpop.f32.mrf.mxu0
        %v405 = vadd.f32 %v336, %v404
        %v406 = vpop.f32.mrf.mxu0
        %407 = vmatprep.mubr.bf16.mxu0 0
        %408 = vmatmul.mubr.bf16.gmra.mxu0 %v365
        %v409 = vpop.f32.mrf.mxu0
        %v410 = vadd.f32 %v336, %v409
        %v411 = vpop.f32.mrf.mxu0
        %v412 = vpop.f32.mrf.mxu0
        %v413 = vadd.f32 %v336, %v412
        %v414 = vpop.f32.mrf.mxu0
        %415 = vdwg.mxu0
        %v416 = vmul.f32 %v402, 0.35355338
        %v417 = vmul.f32 %v405, 0.35355338
        %v418 = vmul.f32 %v410, 0.35355338
        %v419 = vmul.f32 %v413, 0.35355338
        %v420 = vpack.c.bf16 %v417, %v416
        %v421 = vpack.c.bf16 %v419, %v418
        %v422 = vpack.c.bf16 %v405, %v402
        %v423 = vpack.c.bf16 %v413, %v410
        %v424 = vld [vmem:[%s320] sm:$0x1]
        %v426 = vlaneseq
        %v427 = vshrl.u32 %v426, 7
        %v428 = vsub.s32 0, %v427
        %v429 = vrot.slane %v424, %v428
        %433 = vrot.lane.b32.xlu0 %v422, 96
        %v434 = vpop.permute.xlu0 %433
        %435 = vrot.lane.b32.xlu0 %v423, 96
        %v436 = vpop.permute.xlu0 %435
        %vm437 = vcmask 64512
        %v439 = vsel %vm437, %v420, 0
        %v442 = vsel %vm437, %v421, 0
        %v445 = vsel %vm437, %v434, 0
        %v448 = vsel %vm437, %v436, 0
        %450 = vmatprep.subr.bf16.mxu0 0
        %451 = vmatpush1.bf16.xpose.msra.mxu0 0
        %452 = vmatprep.subr.bf16.mxu0 0
        %453 = vmatpush1.bf16.xpose.msra.mxu0 0
        %454 = vmatprep.subr.bf16.mxu0 0
        %455 = vmatpush1.bf16.xpose.msra.mxu0 0
        %456 = vmatprep.subr.bf16.mxu0 0
        %457 = vmatpush1.bf16.xpose.msra.mxu0 0
        %458 = vmatprep.subr.bf16.mxu0 0
        %459 = vmatpush1.bf16.xpose.msra.mxu0 0
        %460 = vmatprep.subr.bf16.mxu0 0
        %461 = vmatpush1.bf16.xpose.msra.mxu0 0
        %462 = vmatprep.subr.bf16.mxu0 0
        %463 = vmatpush1.bf16.xpose.msra.mxu0 %v448
        %464 = vmatprep.subr.bf16.mxu0 0
        %465 = vmatpush1.bf16.xpose.msra.mxu0 %v445
        %466 = vmatprep.subr.bf16.mxu0 0
        %467 = vmatpush2.bf16.xpose.msra.mxu0 0
        %468 = vmatprep.subr.bf16.mxu0 0
        %469 = vmatpush2.bf16.xpose.msra.mxu0 0
        %470 = vmatprep.subr.bf16.mxu0 0
        %471 = vmatpush2.bf16.xpose.msra.mxu0 0
        %472 = vmatprep.subr.bf16.mxu0 0
        %473 = vmatpush2.bf16.xpose.msra.mxu0 0
        %474 = vmatprep.subr.bf16.mxu0 0
        %475 = vmatpush2.bf16.xpose.msra.mxu0 0
        %476 = vmatprep.subr.bf16.mxu0 0
        %477 = vmatpush2.bf16.xpose.msra.mxu0 0
        %478 = vmatprep.subr.bf16.mxu0 0
        %479 = vmatpush2.bf16.xpose.msra.mxu0 0
        %480 = vmatprep.subr.bf16.mxu0 0
        %481 = vmatpush2.bf16.xpose.msra.mxu0 0
        %482 = vmatprep.mubr.bf16.mxu0 0
        %483 = vmatmul.mubr.bf16.gmra.mxu0 %v439
        %v484 = vpop.f32.mrf.mxu0
        %v485 = vadd.f32 %v429, %v484
        %v486 = vpop.f32.mrf.mxu0
        %v487 = vpop.f32.mrf.mxu0
        %v488 = vadd.f32 %v429, %v487
        %v489 = vpop.f32.mrf.mxu0
        %490 = vmatprep.mubr.bf16.mxu0 0
        %491 = vmatmul.mubr.bf16.gmra.mxu0 %v442
        %v492 = vpop.f32.mrf.mxu0
        %v493 = vadd.f32 %v429, %v492
        %v494 = vpop.f32.mrf.mxu0
        %v495 = vpop.f32.mrf.mxu0
        %v496 = vadd.f32 %v429, %v495
        %v497 = vpop.f32.mrf.mxu0
        %498 = vdwg.mxu0
        %v499 = vsel %vm360, %v485, -inf
        %500 = vmax.xlane.f32.xlu0 %v499
        %v501 = vpop.xlane.xlu0 %500
        %v502 = vsel %vm360, %v488, -inf
        %503 = vmax.xlane.f32.xlu0 %v502
        %v504 = vpop.xlane.xlu0 %503
        %v505 = vsel %vm360, %v493, -inf
        %506 = vmax.xlane.f32.xlu0 %v505
        %v507 = vpop.xlane.xlu0 %506
        %v508 = vsel %vm360, %v496, -inf
        %509 = vmax.xlane.f32.xlu0 %v508
        %v510 = vpop.xlane.xlu0 %509
        %v511 = vsub.f32 %v485, %v501
        %v512 = vsub.f32 %v488, %v504
        %v513 = vsub.f32 %v493, %v507
        %v514 = vsub.f32 %v496, %v510
        %v515 = vmul.f32 %v511, 1.442695
        %v516 = vpow.pop %v515
        %v517 = vmul.f32 %v512, 1.442695
        %v518 = vpow.pop %v517
        %v519 = vmul.f32 %v513, 1.442695
        %v520 = vpow.pop %v519
        %v521 = vmul.f32 %v514, 1.442695
        %v522 = vpow.pop %v521
        %v523 = vsel %vm360, %v516, 0.0
        %524 = vadd.xlane.f32.xlu0 %v523
        %v525 = vpop.xlane.xlu0 %524
        %v526 = vsel %vm360, %v518, 0.0
        %527 = vadd.xlane.f32.xlu0 %v526
        %v528 = vpop.xlane.xlu0 %527
        %v529 = vsel %vm360, %v520, 0.0
        %530 = vadd.xlane.f32.xlu0 %v529
        %v531 = vpop.xlane.xlu0 %530
        %v532 = vsel %vm360, %v522, 0.0
        %533 = vadd.xlane.f32.xlu0 %v532
        %v534 = vpop.xlane.xlu0 %533
        %v535 = vrcp.pop %v525
        %v536 = vrcp.pop %v528
        %v537 = vrcp.pop %v531
        %v538 = vrcp.pop %v534
        %v539 = vmul.f32 %v516, %v535
        %v540 = vmul.f32 %v518, %v536
        %v541 = vmul.f32 %v520, %v537
        %v542 = vmul.f32 %v522, %v538
        %v543 = vpack.c.bf16 %v540, %v539
        %v544 = vpack.c.bf16 %v542, %v541
        %v547 = vunpack.c.l.b16 %v543
        %v548 = vunpack.c.h.b16 %v543
        %v549 = vunpack.c.l.b16 %v544
        %v550 = vunpack.c.h.b16 %v544
        %v551 = vpack.c.b16 %v547, %v547
        %v552 = vpack.c.b16 %v548, %v548
        %v553 = vpack.c.b16 %v549, %v549
        %v554 = vpack.c.b16 %v550, %v550
        %vm559 = vcmask 257024
        %560 = vst.msk [vmem:[%s314] sm:$0xf] %vm559, %v551
        %561 = vst.msk [vmem:[%s314 + $0x4] sm:$0xf] %vm559, %v552
        %562 = vst.msk [vmem:[%s314 + $0x8] sm:$0xf] %vm559, %v553
        %563 = vst.msk [vmem:[%s314 + $0xc] sm:$0xf] %vm559, %v554
        %564 = vrot.lane.b32.xlu0 %v422, 64
        %v565 = vpop.permute.xlu0 %564
        %566 = vrot.lane.b32.xlu0 %v423, 64
        %v567 = vpop.permute.xlu0 %566
        %v571 = vsel %vm360, %v543, 0
        %v574 = vsel %vm360, %v544, 0
        %576 = vmatprep.subr.bf16.mxu0 0
        %577 = vmatpush1.bf16.msra.mxu0 0
        %578 = vmatprep.subr.bf16.mxu0 0
        %579 = vmatpush1.bf16.msra.mxu0 0
        %580 = vmatprep.subr.bf16.mxu0 0
        %581 = vmatpush1.bf16.msra.mxu0 0
        %582 = vmatprep.subr.bf16.mxu0 0
        %583 = vmatpush1.bf16.msra.mxu0 0
        %584 = vmatprep.subr.bf16.mxu0 0
        %585 = vmatpush1.bf16.msra.mxu0 0
        %586 = vmatprep.subr.bf16.mxu0 0
        %587 = vmatpush1.bf16.msra.mxu0 0
        %588 = vmatprep.subr.bf16.mxu0 0
        %589 = vmatpush1.bf16.msra.mxu0 %v567
        %590 = vmatprep.subr.bf16.mxu0 0
        %591 = vmatpush1.bf16.msra.mxu0 %v565
        %592 = vmatprep.subr.bf16.mxu0 0
        %593 = vmatpush2.bf16.msra.mxu0 0
        %594 = vmatprep.subr.bf16.mxu0 0
        %595 = vmatpush2.bf16.msra.mxu0 0
        %596 = vmatprep.subr.bf16.mxu0 0
        %597 = vmatpush2.bf16.msra.mxu0 0
        %598 = vmatprep.subr.bf16.mxu0 0
        %599 = vmatpush2.bf16.msra.mxu0 0
        %600 = vmatprep.subr.bf16.mxu0 0
        %601 = vmatpush2.bf16.msra.mxu0 0
        %602 = vmatprep.subr.bf16.mxu0 0
        %603 = vmatpush2.bf16.msra.mxu0 0
        %604 = vmatprep.subr.bf16.mxu0 0
        %605 = vmatpush2.bf16.msra.mxu0 0
        %606 = vmatprep.subr.bf16.mxu0 0
        %607 = vmatpush2.bf16.msra.mxu0 0
        %608 = vmatprep.mubr.bf16.mxu0 0
        %609 = vmatmul.mubr.bf16.gmra.mxu0 %v571
        %v610 = vpop.f32.mrf.mxu0
        %v611 = vadd.f32 0.0, %v610
        %v612 = vpop.f32.mrf.mxu0
        %v613 = vpop.f32.mrf.mxu0
        %v614 = vadd.f32 0.0, %v613
        %v615 = vpop.f32.mrf.mxu0
        %616 = vmatprep.mubr.bf16.mxu0 0
        %617 = vmatmul.mubr.bf16.gmra.mxu0 %v574
        %v618 = vpop.f32.mrf.mxu0
        %v619 = vadd.f32 0.0, %v618
        %v620 = vpop.f32.mrf.mxu0
        %v621 = vpop.f32.mrf.mxu0
        %v622 = vadd.f32 0.0, %v621
        %v623 = vpop.f32.mrf.mxu0
        %624 = vdwg.mxu0
        %625 = vst.msk [vmem:[%s307] sm:$0xff] %vm437, %v611
        %626 = vst.msk [vmem:[%s307 + $0x8] sm:$0xff] %vm437, %v614
        %627 = vst.msk [vmem:[%s307 + $0x10] sm:$0xff] %vm437, %v619
        %628 = vst.msk [vmem:[%s307 + $0x18] sm:$0xff] %vm437, %v622
        %631 = vrot.lane.b32.xlu0 %v420, 120
        %v632 = vpop.permute.xlu0 %631
        %633 = vrot.lane.b32.xlu0 %v421, 120
        %v634 = vpop.permute.xlu0 %633
        %635 = vrot.lane.b32.xlu0 %v422, 88
        %v636 = vpop.permute.xlu0 %635
        %637 = vrot.lane.b32.xlu0 %v423, 88
        %v638 = vpop.permute.xlu0 %637
        %v640 = vsel %vm437, %v632, 0
        %v643 = vsel %vm437, %v634, 0
        %v646 = vsel %vm437, %v636, 0
        %v649 = vsel %vm437, %v638, 0
        %651 = vmatprep.subr.bf16.mxu0 0
        %652 = vmatpush1.bf16.xpose.msra.mxu0 0
        %653 = vmatprep.subr.bf16.mxu0 0
        %654 = vmatpush1.bf16.xpose.msra.mxu0 0
        %655 = vmatprep.subr.bf16.mxu0 0
        %656 = vmatpush1.bf16.xpose.msra.mxu0 0
        %657 = vmatprep.subr.bf16.mxu0 0
        %658 = vmatpush1.bf16.xpose.msra.mxu0 0
        %659 = vmatprep.subr.bf16.mxu0 0
        %660 = vmatpush1.bf16.xpose.msra.mxu0 0
        %661 = vmatprep.subr.bf16.mxu0 0
        %662 = vmatpush1.bf16.xpose.msra.mxu0 0
        %663 = vmatprep.subr.bf16.mxu0 0
        %664 = vmatpush1.bf16.xpose.msra.mxu0 %v649
        %665 = vmatprep.subr.bf16.mxu0 0
        %666 = vmatpush1.bf16.xpose.msra.mxu0 %v646
        %667 = vmatprep.subr.bf16.mxu0 0
        %668 = vmatpush2.bf16.xpose.msra.mxu0 0
        %669 = vmatprep.subr.bf16.mxu0 0
        %670 = vmatpush2.bf16.xpose.msra.mxu0 0
        %671 = vmatprep.subr.bf16.mxu0 0
        %672 = vmatpush2.bf16.xpose.msra.mxu0 0
        %673 = vmatprep.subr.bf16.mxu0 0
        %674 = vmatpush2.bf16.xpose.msra.mxu0 0
        %675 = vmatprep.subr.bf16.mxu0 0
        %676 = vmatpush2.bf16.xpose.msra.mxu0 0
        %677 = vmatprep.subr.bf16.mxu0 0
        %678 = vmatpush2.bf16.xpose.msra.mxu0 0
        %679 = vmatprep.subr.bf16.mxu0 0
        %680 = vmatpush2.bf16.xpose.msra.mxu0 0
        %681 = vmatprep.subr.bf16.mxu0 0
        %682 = vmatpush2.bf16.xpose.msra.mxu0 0
        %683 = vmatprep.mubr.bf16.mxu0 0
        %684 = vmatmul.mubr.bf16.gmra.mxu0 %v640
        %v685 = vpop.f32.mrf.mxu0
        %v686 = vadd.f32 %v429, %v685
        %v687 = vpop.f32.mrf.mxu0
        %v688 = vpop.f32.mrf.mxu0
        %v689 = vadd.f32 %v429, %v688
        %v690 = vpop.f32.mrf.mxu0
        %691 = vmatprep.mubr.bf16.mxu0 0
        %692 = vmatmul.mubr.bf16.gmra.mxu0 %v643
        %v693 = vpop.f32.mrf.mxu0
        %v694 = vadd.f32 %v429, %v693
        %v695 = vpop.f32.mrf.mxu0
        %v696 = vpop.f32.mrf.mxu0
        %v697 = vadd.f32 %v429, %v696
        %v698 = vpop.f32.mrf.mxu0
        %699 = vdwg.mxu0
        %v700 = vsel %vm360, %v686, -inf
        %701 = vmax.xlane.f32.xlu0 %v700
        %v702 = vpop.xlane.xlu0 %701
        %v703 = vsel %vm360, %v689, -inf
        %704 = vmax.xlane.f32.xlu0 %v703
        %v705 = vpop.xlane.xlu0 %704
        %v706 = vsel %vm360, %v694, -inf
        %707 = vmax.xlane.f32.xlu0 %v706
        %v708 = vpop.xlane.xlu0 %707
        %v709 = vsel %vm360, %v697, -inf
        %710 = vmax.xlane.f32.xlu0 %v709
        %v711 = vpop.xlane.xlu0 %710
        %v712 = vsub.f32 %v686, %v702
        %v713 = vsub.f32 %v689, %v705
        %v714 = vsub.f32 %v694, %v708
        %v715 = vsub.f32 %v697, %v711
        %v716 = vmul.f32 %v712, 1.442695
        %v717 = vpow.pop %v716
        %v718 = vmul.f32 %v713, 1.442695
        %v719 = vpow.pop %v718
        %v720 = vmul.f32 %v714, 1.442695
        %v721 = vpow.pop %v720
        %v722 = vmul.f32 %v715, 1.442695
        %v723 = vpow.pop %v722
        %v724 = vsel %vm360, %v717, 0.0
        %725 = vadd.xlane.f32.xlu0 %v724
        %v726 = vpop.xlane.xlu0 %725
        %v727 = vsel %vm360, %v719, 0.0
        %728 = vadd.xlane.f32.xlu0 %v727
        %v729 = vpop.xlane.xlu0 %728
        %v730 = vsel %vm360, %v721, 0.0
        %731 = vadd.xlane.f32.xlu0 %v730
        %v732 = vpop.xlane.xlu0 %731
        %v733 = vsel %vm360, %v723, 0.0
        %734 = vadd.xlane.f32.xlu0 %v733
        %v735 = vpop.xlane.xlu0 %734
        %v736 = vrcp.pop %v726
        %v737 = vrcp.pop %v729
        %v738 = vrcp.pop %v732
        %v739 = vrcp.pop %v735
        %v740 = vmul.f32 %v717, %v736
        %v741 = vmul.f32 %v719, %v737
        %v742 = vmul.f32 %v721, %v738
        %v743 = vmul.f32 %v723, %v739
        %v744 = vpack.c.bf16 %v741, %v740
        %v745 = vpack.c.bf16 %v743, %v742
        %v748 = vunpack.c.l.b16 %v744
        %v749 = vunpack.c.h.b16 %v744
        %v750 = vunpack.c.l.b16 %v745
        %v751 = vunpack.c.h.b16 %v745
        %v752 = vpack.c.b16 %v748, %v748
        %v753 = vpack.c.b16 %v749, %v749
        %v754 = vpack.c.b16 %v750, %v750
        %v755 = vpack.c.b16 %v751, %v751
        %s760 = scalar_lea.vmem %s314, 16 [#allocation8]
        %761 = vst.msk [vmem:[%s760] sm:$0xf] %vm559, %v752
        %762 = vst.msk [vmem:[%s760 + $0x4] sm:$0xf] %vm559, %v753
        %763 = vst.msk [vmem:[%s760 + $0x8] sm:$0xf] %vm559, %v754
        %764 = vst.msk [vmem:[%s760 + $0xc] sm:$0xf] %vm559, %v755
        %765 = vrot.lane.b32.xlu0 %v422, 56
        %v766 = vpop.permute.xlu0 %765
        %767 = vrot.lane.b32.xlu0 %v423, 56
        %v768 = vpop.permute.xlu0 %767
        %v772 = vsel %vm360, %v744, 0
        %v775 = vsel %vm360, %v745, 0
        %777 = vmatprep.subr.bf16.mxu0 0
        %778 = vmatpush1.bf16.msra.mxu0 0
        %779 = vmatprep.subr.bf16.mxu0 0
        %780 = vmatpush1.bf16.msra.mxu0 0
        %781 = vmatprep.subr.bf16.mxu0 0
        %782 = vmatpush1.bf16.msra.mxu0 0
        %783 = vmatprep.subr.bf16.mxu0 0
        %784 = vmatpush1.bf16.msra.mxu0 0
        %785 = vmatprep.subr.bf16.mxu0 0
        %786 = vmatpush1.bf16.msra.mxu0 0
        %787 = vmatprep.subr.bf16.mxu0 0
        %788 = vmatpush1.bf16.msra.mxu0 0
        %789 = vmatprep.subr.bf16.mxu0 0
        %790 = vmatpush1.bf16.msra.mxu0 %v768
        %791 = vmatprep.subr.bf16.mxu0 0
        %792 = vmatpush1.bf16.msra.mxu0 %v766
        %793 = vmatprep.subr.bf16.mxu0 0
        %794 = vmatpush2.bf16.msra.mxu0 0
        %795 = vmatprep.subr.bf16.mxu0 0
        %796 = vmatpush2.bf16.msra.mxu0 0
        %797 = vmatprep.subr.bf16.mxu0 0
        %798 = vmatpush2.bf16.msra.mxu0 0
        %799 = vmatprep.subr.bf16.mxu0 0
        %800 = vmatpush2.bf16.msra.mxu0 0
        %801 = vmatprep.subr.bf16.mxu0 0
        %802 = vmatpush2.bf16.msra.mxu0 0
        %803 = vmatprep.subr.bf16.mxu0 0
        %804 = vmatpush2.bf16.msra.mxu0 0
        %805 = vmatprep.subr.bf16.mxu0 0
        %806 = vmatpush2.bf16.msra.mxu0 0
        %807 = vmatprep.subr.bf16.mxu0 0
        %808 = vmatpush2.bf16.msra.mxu0 0
        %809 = vmatprep.mubr.bf16.mxu0 0
        %810 = vmatmul.mubr.bf16.gmra.mxu0 %v772
        %v811 = vpop.f32.mrf.mxu0
        %v812 = vadd.f32 0.0, %v811
        %v813 = vpop.f32.mrf.mxu0
        %v814 = vpop.f32.mrf.mxu0
        %v815 = vadd.f32 0.0, %v814
        %v816 = vpop.f32.mrf.mxu0
        %817 = vmatprep.mubr.bf16.mxu0 0
        %818 = vmatmul.mubr.bf16.gmra.mxu0 %v775
        %v819 = vpop.f32.mrf.mxu0
        %v820 = vadd.f32 0.0, %v819
        %v821 = vpop.f32.mrf.mxu0
        %v822 = vpop.f32.mrf.mxu0
        %v823 = vadd.f32 0.0, %v822
        %v824 = vpop.f32.mrf.mxu0
        %825 = vdwg.mxu0
        %830 = vrot.lane.b32.xlu0 %v812, 8
        %v831 = vpop.permute.xlu0 %830
        %832 = vrot.lane.b32.xlu0 %v815, 8
        %v833 = vpop.permute.xlu0 %832
        %834 = vrot.lane.b32.xlu0 %v820, 8
        %v835 = vpop.permute.xlu0 %834
        %836 = vrot.lane.b32.xlu0 %v823, 8
        %v837 = vpop.permute.xlu0 %836
        %vm842 = vcmask 130112
        %843 = vst.msk [vmem:[%s307] sm:$0xff] %vm842, %v831
        %844 = vst.msk [vmem:[%s307 + $0x8] sm:$0xff] %vm842, %v833
        %845 = vst.msk [vmem:[%s307 + $0x10] sm:$0xff] %vm842, %v835
        %846 = vst.msk [vmem:[%s307 + $0x18] sm:$0xff] %vm842, %v837
        %847 = vrot.lane.b32.xlu0 %v420, 112
        %v848 = vpop.permute.xlu0 %847
        %849 = vrot.lane.b32.xlu0 %v421, 112
        %v850 = vpop.permute.xlu0 %849
        %851 = vrot.lane.b32.xlu0 %v422, 80
        %v852 = vpop.permute.xlu0 %851
        %853 = vrot.lane.b32.xlu0 %v423, 80
        %v854 = vpop.permute.xlu0 %853
        %v856 = vsel %vm437, %v848, 0
        %v859 = vsel %vm437, %v850, 0
        %v862 = vsel %vm437, %v852, 0
        %v865 = vsel %vm437, %v854, 0
        %867 = vmatprep.subr.bf16.mxu0 0
        %868 = vmatpush1.bf16.xpose.msra.mxu0 0
        %869 = vmatprep.subr.bf16.mxu0 0
        %870 = vmatpush1.bf16.xpose.msra.mxu0 0
        %871 = vmatprep.subr.bf16.mxu0 0
        %872 = vmatpush1.bf16.xpose.msra.mxu0 0
        %873 = vmatprep.subr.bf16.mxu0 0
        %874 = vmatpush1.bf16.xpose.msra.mxu0 0
        %875 = vmatprep.subr.bf16.mxu0 0
        %876 = vmatpush1.bf16.xpose.msra.mxu0 0
        %877 = vmatprep.subr.bf16.mxu0 0
        %878 = vmatpush1.bf16.xpose.msra.mxu0 0
        %879 = vmatprep.subr.bf16.mxu0 0
        %880 = vmatpush1.bf16.xpose.msra.mxu0 %v865
        %881 = vmatprep.subr.bf16.mxu0 0
        %882 = vmatpush1.bf16.xpose.msra.mxu0 %v862
        %883 = vmatprep.subr.bf16.mxu0 0
        %884 = vmatpush2.bf16.xpose.msra.mxu0 0
        %885 = vmatprep.subr.bf16.mxu0 0
        %886 = vmatpush2.bf16.xpose.msra.mxu0 0
        %887 = vmatprep.subr.bf16.mxu0 0
        %888 = vmatpush2.bf16.xpose.msra.mxu0 0
        %889 = vmatprep.subr.bf16.mxu0 0
        %890 = vmatpush2.bf16.xpose.msra.mxu0 0
        %891 = vmatprep.subr.bf16.mxu0 0
        %892 = vmatpush2.bf16.xpose.msra.mxu0 0
        %893 = vmatprep.subr.bf16.mxu0 0
        %894 = vmatpush2.bf16.xpose.msra.mxu0 0
        %895 = vmatprep.subr.bf16.mxu0 0
        %896 = vmatpush2.bf16.xpose.msra.mxu0 0
        %897 = vmatprep.subr.bf16.mxu0 0
        %898 = vmatpush2.bf16.xpose.msra.mxu0 0
        %899 = vmatprep.mubr.bf16.mxu0 0
        %900 = vmatmul.mubr.bf16.gmra.mxu0 %v856
        %v901 = vpop.f32.mrf.mxu0
        %v902 = vadd.f32 %v429, %v901
        %v903 = vpop.f32.mrf.mxu0
        %v904 = vpop.f32.mrf.mxu0
        %v905 = vadd.f32 %v429, %v904
        %v906 = vpop.f32.mrf.mxu0
        %907 = vmatprep.mubr.bf16.mxu0 0
        %908 = vmatmul.mubr.bf16.gmra.mxu0 %v859
        %v909 = vpop.f32.mrf.mxu0
        %v910 = vadd.f32 %v429, %v909
        %v911 = vpop.f32.mrf.mxu0
        %v912 = vpop.f32.mrf.mxu0
        %v913 = vadd.f32 %v429, %v912
        %v914 = vpop.f32.mrf.mxu0
        %915 = vdwg.mxu0
        %v916 = vsel %vm360, %v902, -inf
        %917 = vmax.xlane.f32.xlu0 %v916
        %v918 = vpop.xlane.xlu0 %917
        %v919 = vsel %vm360, %v905, -inf
        %920 = vmax.xlane.f32.xlu0 %v919
        %v921 = vpop.xlane.xlu0 %920
        %v922 = vsel %vm360, %v910, -inf
        %923 = vmax.xlane.f32.xlu0 %v922
        %v924 = vpop.xlane.xlu0 %923
        %v925 = vsel %vm360, %v913, -inf
        %926 = vmax.xlane.f32.xlu0 %v925
        %v927 = vpop.xlane.xlu0 %926
        %v928 = vsub.f32 %v902, %v918
        %v929 = vsub.f32 %v905, %v921
        %v930 = vsub.f32 %v910, %v924
        %v931 = vsub.f32 %v913, %v927
        %v932 = vmul.f32 %v928, 1.442695
        %v933 = vpow.pop %v932
        %v934 = vmul.f32 %v929, 1.442695
        %v935 = vpow.pop %v934
        %v936 = vmul.f32 %v930, 1.442695
        %v937 = vpow.pop %v936
        %v938 = vmul.f32 %v931, 1.442695
        %v939 = vpow.pop %v938
        %v940 = vsel %vm360, %v933, 0.0
        %941 = vadd.xlane.f32.xlu0 %v940
        %v942 = vpop.xlane.xlu0 %941
        %v943 = vsel %vm360, %v935, 0.0
        %944 = vadd.xlane.f32.xlu0 %v943
        %v945 = vpop.xlane.xlu0 %944
        %v946 = vsel %vm360, %v937, 0.0
        %947 = vadd.xlane.f32.xlu0 %v946
        %v948 = vpop.xlane.xlu0 %947
        %v949 = vsel %vm360, %v939, 0.0
        %950 = vadd.xlane.f32.xlu0 %v949
        %v951 = vpop.xlane.xlu0 %950
        %v952 = vrcp.pop %v942
        %v953 = vrcp.pop %v945
        %v954 = vrcp.pop %v948
        %v955 = vrcp.pop %v951
        %v956 = vmul.f32 %v933, %v952
        %v957 = vmul.f32 %v935, %v953
        %v958 = vmul.f32 %v937, %v954
        %v959 = vmul.f32 %v939, %v955
        %v960 = vpack.c.bf16 %v957, %v956
        %v961 = vpack.c.bf16 %v959, %v958
        %v964 = vunpack.c.l.b16 %v960
        %v965 = vunpack.c.h.b16 %v960
        %v966 = vunpack.c.l.b16 %v961
        %v967 = vunpack.c.h.b16 %v961
        %v968 = vpack.c.b16 %v964, %v964
        %v969 = vpack.c.b16 %v965, %v965
        %v970 = vpack.c.b16 %v966, %v966
        %v971 = vpack.c.b16 %v967, %v967
        %s976 = scalar_lea.vmem %s314, 32 [#allocation8]
        %977 = vst.msk [vmem:[%s976] sm:$0xf] %vm559, %v968
        %978 = vst.msk [vmem:[%s976 + $0x4] sm:$0xf] %vm559, %v969
        %979 = vst.msk [vmem:[%s976 + $0x8] sm:$0xf] %vm559, %v970
        %980 = vst.msk [vmem:[%s976 + $0xc] sm:$0xf] %vm559, %v971
        %981 = vrot.lane.b32.xlu0 %v422, 48
        %v982 = vpop.permute.xlu0 %981
        %983 = vrot.lane.b32.xlu0 %v423, 48
        %v984 = vpop.permute.xlu0 %983
        %v988 = vsel %vm360, %v960, 0
        %v991 = vsel %vm360, %v961, 0
        %993 = vmatprep.subr.bf16.mxu0 0
        %994 = vmatpush1.bf16.msra.mxu0 0
        %995 = vmatprep.subr.bf16.mxu0 0
        %996 = vmatpush1.bf16.msra.mxu0 0
        %997 = vmatprep.subr.bf16.mxu0 0
        %998 = vmatpush1.bf16.msra.mxu0 0
        %999 = vmatprep.subr.bf16.mxu0 0
        %1000 = vmatpush1.bf16.msra.mxu0 0
        %1001 = vmatprep.subr.bf16.mxu0 0
        %1002 = vmatpush1.bf16.msra.mxu0 0
        %1003 = vmatprep.subr.bf16.mxu0 0
        %1004 = vmatpush1.bf16.msra.mxu0 0
        %1005 = vmatprep.subr.bf16.mxu0 0
        %1006 = vmatpush1.bf16.msra.mxu0 %v984
        %1007 = vmatprep.subr.bf16.mxu0 0
        %1008 = vmatpush1.bf16.msra.mxu0 %v982
        %1009 = vmatprep.subr.bf16.mxu0 0
        %1010 = vmatpush2.bf16.msra.mxu0 0
        %1011 = vmatprep.subr.bf16.mxu0 0
        %1012 = vmatpush2.bf16.msra.mxu0 0
        %1013 = vmatprep.subr.bf16.mxu0 0
        %1014 = vmatpush2.bf16.msra.mxu0 0
        %1015 = vmatprep.subr.bf16.mxu0 0
        %1016 = vmatpush2.bf16.msra.mxu0 0
        %1017 = vmatprep.subr.bf16.mxu0 0
        %1018 = vmatpush2.bf16.msra.mxu0 0
        %1019 = vmatprep.subr.bf16.mxu0 0
        %1020 = vmatpush2.bf16.msra.mxu0 0
        %1021 = vmatprep.subr.bf16.mxu0 0
        %1022 = vmatpush2.bf16.msra.mxu0 0
        %1023 = vmatprep.subr.bf16.mxu0 0
        %1024 = vmatpush2.bf16.msra.mxu0 0
        %1025 = vmatprep.mubr.bf16.mxu0 0
        %1026 = vmatmul.mubr.bf16.gmra.mxu0 %v988
        %v1027 = vpop.f32.mrf.mxu0
        %v1028 = vadd.f32 0.0, %v1027
        %v1029 = vpop.f32.mrf.mxu0
        %v1030 = vpop.f32.mrf.mxu0
        %v1031 = vadd.f32 0.0, %v1030
        %v1032 = vpop.f32.mrf.mxu0
        %1033 = vmatprep.mubr.bf16.mxu0 0
        %1034 = vmatmul.mubr.bf16.gmra.mxu0 %v991
        %v1035 = vpop.f32.mrf.mxu0
        %v1036 = vadd.f32 0.0, %v1035
        %v1037 = vpop.f32.mrf.mxu0
        %v1038 = vpop.f32.mrf.mxu0
        %v1039 = vadd.f32 0.0, %v1038
        %v1040 = vpop.f32.mrf.mxu0
        %1041 = vdwg.mxu0
        %1046 = vrot.lane.b32.xlu0 %v1028, 16
        %v1047 = vpop.permute.xlu0 %1046
        %1048 = vrot.lane.b32.xlu0 %v1031, 16
        %v1049 = vpop.permute.xlu0 %1048
        %1050 = vrot.lane.b32.xlu0 %v1036, 16
        %v1051 = vpop.permute.xlu0 %1050
        %1052 = vrot.lane.b32.xlu0 %v1039, 16
        %v1053 = vpop.permute.xlu0 %1052
        %vm1058 = vcmask 195712
        %1059 = vst.msk [vmem:[%s307] sm:$0xff] %vm1058, %v1047
        %1060 = vst.msk [vmem:[%s307 + $0x8] sm:$0xff] %vm1058, %v1049
        %1061 = vst.msk [vmem:[%s307 + $0x10] sm:$0xff] %vm1058, %v1051
        %1062 = vst.msk [vmem:[%s307 + $0x18] sm:$0xff] %vm1058, %v1053
        %1063 = vrot.lane.b32.xlu0 %v420, 104
        %v1064 = vpop.permute.xlu0 %1063
        %1065 = vrot.lane.b32.xlu0 %v421, 104
        %v1066 = vpop.permute.xlu0 %1065
        %1067 = vrot.lane.b32.xlu0 %v422, 72
        %v1068 = vpop.permute.xlu0 %1067
        %1069 = vrot.lane.b32.xlu0 %v423, 72
        %v1070 = vpop.permute.xlu0 %1069
        %v1072 = vsel %vm437, %v1064, 0
        %v1075 = vsel %vm437, %v1066, 0
        %v1078 = vsel %vm437, %v1068, 0
        %v1081 = vsel %vm437, %v1070, 0
        %1083 = vmatprep.subr.bf16.mxu0 0
        %1084 = vmatpush1.bf16.xpose.msra.mxu0 0
        %1085 = vmatprep.subr.bf16.mxu0 0
        %1086 = vmatpush1.bf16.xpose.msra.mxu0 0
        %1087 = vmatprep.subr.bf16.mxu0 0
        %1088 = vmatpush1.bf16.xpose.msra.mxu0 0
        %1089 = vmatprep.subr.bf16.mxu0 0
        %1090 = vmatpush1.bf16.xpose.msra.mxu0 0
        %1091 = vmatprep.subr.bf16.mxu0 0
        %1092 = vmatpush1.bf16.xpose.msra.mxu0 0
        %1093 = vmatprep.subr.bf16.mxu0 0
        %1094 = vmatpush1.bf16.xpose.msra.mxu0 0
        %1095 = vmatprep.subr.bf16.mxu0 0
        %1096 = vmatpush1.bf16.xpose.msra.mxu0 %v1081
        %1097 = vmatprep.subr.bf16.mxu0 0
        %1098 = vmatpush1.bf16.xpose.msra.mxu0 %v1078
        %1099 = vmatprep.subr.bf16.mxu0 0
        %1100 = vmatpush2.bf16.xpose.msra.mxu0 0
        %1101 = vmatprep.subr.bf16.mxu0 0
        %1102 = vmatpush2.bf16.xpose.msra.mxu0 0
        %1103 = vmatprep.subr.bf16.mxu0 0
        %1104 = vmatpush2.bf16.xpose.msra.mxu0 0
        %1105 = vmatprep.subr.bf16.mxu0 0
        %1106 = vmatpush2.bf16.xpose.msra.mxu0 0
        %1107 = vmatprep.subr.bf16.mxu0 0
        %1108 = vmatpush2.bf16.xpose.msra.mxu0 0
        %1109 = vmatprep.subr.bf16.mxu0 0
        %1110 = vmatpush2.bf16.xpose.msra.mxu0 0
        %1111 = vmatprep.subr.bf16.mxu0 0
        %1112 = vmatpush2.bf16.xpose.msra.mxu0 0
        %1113 = vmatprep.subr.bf16.mxu0 0
        %1114 = vmatpush2.bf16.xpose.msra.mxu0 0
        %1115 = vmatprep.mubr.bf16.mxu0 0
        %1116 = vmatmul.mubr.bf16.gmra.mxu0 %v1072
        %v1117 = vpop.f32.mrf.mxu0
        %v1118 = vadd.f32 %v429, %v1117
        %v1119 = vpop.f32.mrf.mxu0
        %v1120 = vpop.f32.mrf.mxu0
        %v1121 = vadd.f32 %v429, %v1120
        %v1122 = vpop.f32.mrf.mxu0
        %1123 = vmatprep.mubr.bf16.mxu0 0
        %1124 = vmatmul.mubr.bf16.gmra.mxu0 %v1075
        %v1125 = vpop.f32.mrf.mxu0
        %v1126 = vadd.f32 %v429, %v1125
        %v1127 = vpop.f32.mrf.mxu0
        %v1128 = vpop.f32.mrf.mxu0
        %v1129 = vadd.f32 %v429, %v1128
        %v1130 = vpop.f32.mrf.mxu0
        %1131 = vdwg.mxu0
        %v1132 = vsel %vm360, %v1118, -inf
        %1133 = vmax.xlane.f32.xlu0 %v1132
        %v1134 = vpop.xlane.xlu0 %1133
        %v1135 = vsel %vm360, %v1121, -inf
        %1136 = vmax.xlane.f32.xlu0 %v1135
        %v1137 = vpop.xlane.xlu0 %1136
        %v1138 = vsel %vm360, %v1126, -inf
        %1139 = vmax.xlane.f32.xlu0 %v1138
        %v1140 = vpop.xlane.xlu0 %1139
        %v1141 = vsel %vm360, %v1129, -inf
        %1142 = vmax.xlane.f32.xlu0 %v1141
        %v1143 = vpop.xlane.xlu0 %1142
        %v1144 = vsub.f32 %v1118, %v1134
        %v1145 = vsub.f32 %v1121, %v1137
        %v1146 = vsub.f32 %v1126, %v1140
        %v1147 = vsub.f32 %v1129, %v1143
        %v1148 = vmul.f32 %v1144, 1.442695
        %v1149 = vpow.pop %v1148
        %v1150 = vmul.f32 %v1145, 1.442695
        %v1151 = vpow.pop %v1150
        %v1152 = vmul.f32 %v1146, 1.442695
        %v1153 = vpow.pop %v1152
        %v1154 = vmul.f32 %v1147, 1.442695
        %v1155 = vpow.pop %v1154
        %v1156 = vsel %vm360, %v1149, 0.0
        %1157 = vadd.xlane.f32.xlu0 %v1156
        %v1158 = vpop.xlane.xlu0 %1157
        %v1159 = vsel %vm360, %v1151, 0.0
        %1160 = vadd.xlane.f32.xlu0 %v1159
        %v1161 = vpop.xlane.xlu0 %1160
        %v1162 = vsel %vm360, %v1153, 0.0
        %1163 = vadd.xlane.f32.xlu0 %v1162
        %v1164 = vpop.xlane.xlu0 %1163
        %v1165 = vsel %vm360, %v1155, 0.0
        %1166 = vadd.xlane.f32.xlu0 %v1165
        %v1167 = vpop.xlane.xlu0 %1166
        %v1168 = vrcp.pop %v1158
        %v1169 = vrcp.pop %v1161
        %v1170 = vrcp.pop %v1164
        %v1171 = vrcp.pop %v1167
        %v1172 = vmul.f32 %v1149, %v1168
        %v1173 = vmul.f32 %v1151, %v1169
        %v1174 = vmul.f32 %v1153, %v1170
        %v1175 = vmul.f32 %v1155, %v1171
        %v1176 = vpack.c.bf16 %v1173, %v1172
        %v1177 = vpack.c.bf16 %v1175, %v1174
        %v1180 = vunpack.c.l.b16 %v1176
        %v1181 = vunpack.c.h.b16 %v1176
        %v1182 = vunpack.c.l.b16 %v1177
        %v1183 = vunpack.c.h.b16 %v1177
        %v1184 = vpack.c.b16 %v1180, %v1180
        %v1185 = vpack.c.b16 %v1181, %v1181
        %v1186 = vpack.c.b16 %v1182, %v1182
        %v1187 = vpack.c.b16 %v1183, %v1183
        %s1192 = scalar_lea.vmem %s314, 48 [#allocation8]
        %1193 = vst.msk [vmem:[%s1192] sm:$0xf] %vm559, %v1184
        %1194 = vst.msk [vmem:[%s1192 + $0x4] sm:$0xf] %vm559, %v1185
        %1195 = vst.msk [vmem:[%s1192 + $0x8] sm:$0xf] %vm559, %v1186
        %1196 = vst.msk [vmem:[%s1192 + $0xc] sm:$0xf] %vm559, %v1187
        %1197 = vrot.lane.b32.xlu0 %v422, 40
        %v1198 = vpop.permute.xlu0 %1197
        %1199 = vrot.lane.b32.xlu0 %v423, 40
        %v1200 = vpop.permute.xlu0 %1199
        %v1204 = vsel %vm360, %v1176, 0
        %v1207 = vsel %vm360, %v1177, 0
        %1209 = vmatprep.subr.bf16.mxu0 0
        %1210 = vmatpush1.bf16.msra.mxu0 0
        %1211 = vmatprep.subr.bf16.mxu0 0
        %1212 = vmatpush1.bf16.msra.mxu0 0
        %1213 = vmatprep.subr.bf16.mxu0 0
        %1214 = vmatpush1.bf16.msra.mxu0 0
        %1215 = vmatprep.subr.bf16.mxu0 0
        %1216 = vmatpush1.bf16.msra.mxu0 0
        %1217 = vmatprep.subr.bf16.mxu0 0
        %1218 = vmatpush1.bf16.msra.mxu0 0
        %1219 = vmatprep.subr.bf16.mxu0 0
        %1220 = vmatpush1.bf16.msra.mxu0 0
        %1221 = vmatprep.subr.bf16.mxu0 0
        %1222 = vmatpush1.bf16.msra.mxu0 %v1200
        %1223 = vmatprep.subr.bf16.mxu0 0
        %1224 = vmatpush1.bf16.msra.mxu0 %v1198
        %1225 = vmatprep.subr.bf16.mxu0 0
        %1226 = vmatpush2.bf16.msra.mxu0 0
        %1227 = vmatprep.subr.bf16.mxu0 0
        %1228 = vmatpush2.bf16.msra.mxu0 0
        %1229 = vmatprep.subr.bf16.mxu0 0
        %1230 = vmatpush2.bf16.msra.mxu0 0
        %1231 = vmatprep.subr.bf16.mxu0 0
        %1232 = vmatpush2.bf16.msra.mxu0 0
        %1233 = vmatprep.subr.bf16.mxu0 0
        %1234 = vmatpush2.bf16.msra.mxu0 0
        %1235 = vmatprep.subr.bf16.mxu0 0
        %1236 = vmatpush2.bf16.msra.mxu0 0
        %1237 = vmatprep.subr.bf16.mxu0 0
        %1238 = vmatpush2.bf16.msra.mxu0 0
        %1239 = vmatprep.subr.bf16.mxu0 0
        %1240 = vmatpush2.bf16.msra.mxu0 0
        %1241 = vmatprep.mubr.bf16.mxu0 0
        %1242 = vmatmul.mubr.bf16.gmra.mxu0 %v1204
        %v1243 = vpop.f32.mrf.mxu0
        %v1244 = vadd.f32 0.0, %v1243
        %v1245 = vpop.f32.mrf.mxu0
        %v1246 = vpop.f32.mrf.mxu0
        %v1247 = vadd.f32 0.0, %v1246
        %v1248 = vpop.f32.mrf.mxu0
        %1249 = vmatprep.mubr.bf16.mxu0 0
        %1250 = vmatmul.mubr.bf16.gmra.mxu0 %v1207
        %v1251 = vpop.f32.mrf.mxu0
        %v1252 = vadd.f32 0.0, %v1251
        %v1253 = vpop.f32.mrf.mxu0
        %v1254 = vpop.f32.mrf.mxu0
        %v1255 = vadd.f32 0.0, %v1254
        %v1256 = vpop.f32.mrf.mxu0
        %1257 = vdwg.mxu0
        %1262 = vrot.lane.b32.xlu0 %v1244, 24
        %v1263 = vpop.permute.xlu0 %1262
        %1264 = vrot.lane.b32.xlu0 %v1247, 24
        %v1265 = vpop.permute.xlu0 %1264
        %1266 = vrot.lane.b32.xlu0 %v1252, 24
        %v1267 = vpop.permute.xlu0 %1266
        %1268 = vrot.lane.b32.xlu0 %v1255, 24
        %v1269 = vpop.permute.xlu0 %1268
        %vm1274 = vcmask 261312
        %1275 = vst.msk [vmem:[%s307] sm:$0xff] %vm1274, %v1263
        %1276 = vst.msk [vmem:[%s307 + $0x8] sm:$0xff] %vm1274, %v1265
        %1277 = vst.msk [vmem:[%s307 + $0x10] sm:$0xff] %vm1274, %v1267
        %1278 = vst.msk [vmem:[%s307 + $0x18] sm:$0xff] %vm1274, %v1269
        %s1279 = sand.u32 %s153, 1
        %s1280 = scalar_lea.sflag [#allocation4], %s1279
        %s1281 = sand.u32 %s153, 1
        %s1282 = smul.addr %s1281, 32
        %s1283 = scalar_lea.vmem [#allocation7], %s1282
        %s1284 = sand.u32 %s181, 1
        %s1285 = scalar_lea.sflag [#allocation9], %s1284
        %s1286 = sand.u32 %s181, 1
        %s1287 = smul.addr %s1286, 64
        %s1288 = scalar_lea.vmem [#allocation8], %s1287
        // Predicated region
        $region45: #{tpu_custom_call.1} parent=35 // pred_check
          %p1289 = pneg %p163
        $region46: #{tpu_custom_call.1} parent=35 // pred_check_branch
          %1291 = sbr.rel (%p1289) target = $region48
        $region47: #{tpu_custom_call.1} parent=35 // pred_region
          %s1293 = ssub.s32 512, 512
          %1294 = vsyncadd %s1280, %s1293
          %s1295 = smul.addr %s31, 4
          %s1296 = sadd.s32 %s32, %s1295
          %s1297 = smul.addr %s1296, 128
          %s1298 = scalar_lea.hbm %s4, %s1297
          %s1299 = sshll.u32 %s1283, 4
          %s1300 = int_to_ptr.vmem [resolvable:$true] %s1299
          %1305 = dma.vmem_to_hbm [thread:$0]  %s1300, 512, %s1298, %s1280, 128, 128, 8
        $region48: #{tpu_custom_call.1} parent=35 // pred_fallthru
          _
        // Predicated region
        $region49: #{tpu_custom_call.1} parent=35 // pred_check
          %p1306 = pneg %p191
        $region50: #{tpu_custom_call.1} parent=35 // pred_check_branch
          %1308 = sbr.rel (%p1306) target = $region52
        $region51: #{tpu_custom_call.1} parent=35 // pred_region
          %s1309 = smul.u32 4, %s32
          %s1311 = ssub.s32 1024, 1024
          %1312 = vsyncadd %s1285, %s1311
          %s1313 = smul.addr %s1309, 4
          %s1314 = smul.addr %s31, 16
          %s1315 = sadd.s32 %s1313, %s1314
          %s1316 = smul.addr %s1315, 64
          %s1317 = scalar_lea.hbm %s5, %s1316
          %s1318 = sshll.u32 %s1288, 4
          %s1319 = int_to_ptr.vmem [resolvable:$true] %s1318
          %1324 = dma.vmem_to_hbm [thread:$0]  %s1319, 1024, %s1317, %s1285, 64, 64, 4
        $region52: #{tpu_custom_call.1} parent=35 // pred_fallthru
          _
      $region36: #{tpu_custom_call.1} parent=5 // pred_fallthru
        _
      %p1325 = scmp.le.s32.totalorder 2, %s22
      // Predicated region
      $region53: #{tpu_custom_call.1} parent=5 // pred_check
        %p1326 = pneg %p1325
      $region54: #{tpu_custom_call.1} parent=5 // pred_check_branch
        %1328 = sbr.rel (%p1326) target = $region56
      $region55: #{tpu_custom_call.1} parent=5 // pred_region
        %s1329 = ssub.s32 %s22, 2
        // Predicated region
        $region57: #{tpu_custom_call.1} parent=55 // pred_check
          %p1330 = pneg %p169
        $region58: #{tpu_custom_call.1} parent=55 // pred_check_branch
          %1332 = sbr.rel (%p1330) target = $region60
        $region59: #{tpu_custom_call.1} parent=55 // pred_region
          %s1333 = sand.u32 %s154, 1
          %s1334 = scalar_lea.sflag [#allocation4], %s1333
          %s1335 = sand.u32 %s154, 1
          %s1336 = smul.addr %s1335, 32
          %s1337 = scalar_lea.vmem [#allocation7], %s1336
          %1338 = dma.done %s1334, 512
        $region60: #{tpu_custom_call.1} parent=55 // pred_fallthru
          _
        // Predicated region
        $region61: #{tpu_custom_call.1} parent=55 // pred_check
          %p1339 = pneg %p197
        $region62: #{tpu_custom_call.1} parent=55 // pred_check_branch
          %1341 = sbr.rel (%p1339) target = $region64
        $region63: #{tpu_custom_call.1} parent=55 // pred_region
          %s1342 = sand.u32 %s182, 1
          %s1343 = scalar_lea.sflag [#allocation9], %s1342
          %s1344 = sand.u32 %s182, 1
          %s1345 = smul.addr %s1344, 64
          %s1346 = scalar_lea.vmem [#allocation8], %s1345
          %1347 = dma.done %s1343, 1024
        $region64: #{tpu_custom_call.1} parent=55 // pred_fallthru
          _
      $region56: #{tpu_custom_call.1} parent=5 // pred_fallthru
        _
    $region6: #{tpu_custom_call.1} parent=1 // loop_footer
      %s26 = sadd.s32 1, %s22
    $region7: #{tpu_custom_call.1} parent=1 // loop_footer_branch
      %21 = sbr.rel target = $region3
    $region8: #{tpu_custom_call.1} parent=1 // loop_exit
      _
    %1348 = vsyncpa [#allocation3], 1
    %s1349 = scalar_lea.sflag [#allocation3], 1
    %1350 = vsyncpa %s1349, 1
    %1351 = vsyncpa [#allocation6], 1
    %1352 = vsyncpa [#allocation4], 1
    %s1353 = scalar_lea.sflag [#allocation4], 1
    %1354 = vsyncpa %s1353, 1
    %1355 = vsyncpa [#allocation9], 1
    %s1356 = scalar_lea.sflag [#allocation9], 1
    %1357 = vsyncpa %s1356, 1

</llo_original>
